<compile_context>
chip_gen: v7x
topology: tpu7x:2x2x1
jax: 0.10.0
libtpu: 0.0.40
codegen_flags: <defaults>
</compile_context>

<pallas_src>
import jax
import jax.numpy as jnp
from jax.experimental import pallas as pl
from jax.experimental.pallas import tpu as pltpu

HIDDEN = 64      # hidden width
N_HH = 6         # number of 64->64 hidden linears per net (layers[1..7])
N_NETS = 7       # order: net, r1, r2, r3, r5, r6, r10
OUT_PAD = 8      # final-layer outputs padded to 8 rows (net has 8, r-nets 1)
MAX_TN = 1024    # max batch-tile width (lanes)
_SMALL_N_FALLBACK = 256

_INV_SQRT2 = 0.7071067811865476
_SQRT_2_OVER_PI = 0.7978845608028654


def _gelu_exact(x):
    # PyTorch nn.GELU() default (approximate='none'): 0.5*x*(1 + erf(x/sqrt(2)))
    # (x * 1/sqrt(2) instead of x / sqrt(2): ~1-ulp deviation, documented.)
    return 0.5 * x * (1.0 + jax.lax.erf(x * _INV_SQRT2))


def _gelu_tanh(x):
    # tanh-form GELU: transcendental goes to the EUP slot instead of VALU.
    return 0.5 * x * (1.0 + jnp.tanh(_SQRT_2_OVER_PI * (x + 0.044715 * x * x * x)))


def _make_kernel(approx_gelu: bool):
    gelu = _gelu_tanh if approx_gelu else _gelu_exact

    def _pitlnn_kernel(t_ref, w0_ref, b0_ref, wh_ref, bh_ref, wl_ref, bl_ref,
                       out_ref):
        # One (net, batch-tile) pair per grid step.  Transposed layout:
        #   t_ref:  (1, TN)
        #   w0_ref: (1, 64, 1)      b0_ref: (1, 64, 1)
        #   wh_ref: (1, 6, 64, 64)  bh_ref: (1, 6, 64, 1)
        #   wl_ref: (1, 8, 64)      bl_ref: (1, 8, 1)
        #   out_ref:(1, 8, TN)
        t = t_ref[...]                                           # (1, TN)
        # First layer has contract dim K=1 -> VPU broadcast outer product.
        h = w0_ref[0] * t + b0_ref[0]                            # (64, TN)
        h = gelu(h)
        for l in range(N_HH):                                    # small, unrolled
            h = jnp.dot(wh_ref[0, l], h,
                        preferred_element_type=jnp.float32)      # (64, TN)
            h = gelu(h + bh_ref[0, l])
        out = jnp.dot(wl_ref[0], h,
                      preferred_element_type=jnp.float32)        # (8, TN)
        out = out + bl_ref[0]
        out_ref[0] = out.astype(out_ref.dtype)                   # lane-dense store

    return _pitlnn_kernel


def _round_up(x, m):
    return ((x + m - 1) // m) * m


def _cdiv(a, b):
    return -(-a // b)


def pitlnn_pallas(t, params, *, approx_gelu=False):
    """Returns stacked padded outputs of shape (7, 8, N) in float32 (transposed)."""
    N = t.shape[0]
    # Adaptive lane-dense batch tile: multiple of 128, <=1024, padding < 1 tile.
    n_tiles = _cdiv(N, MAX_TN)
    TN = _round_up(_cdiv(N, n_tiles), 128)
    n_tiles = _cdiv(N, TN)
    N_pad = n_tiles * TN

    # Input as a single lane-dense row (1, N_pad).
    t_row = jnp.pad(t.astype(jnp.float32)[:, 0], (0, N_pad - N))[None, :]

    # Transpose weights once in the wrapper (cheap, ~200 KB total).
    w0_t = jnp.transpose(params["w0"], (0, 2, 1))       # (7, 64, 1)
    b0_t = jnp.transpose(params["b0"], (0, 2, 1))       # (7, 64, 1)
    wh_t = jnp.transpose(params["wh"], (0, 1, 3, 2))    # (7, 6, 64, 64)
    bh_t = jnp.transpose(params["bh"], (0, 1, 3, 2))    # (7, 6, 64, 1)
    wl_t = jnp.transpose(params["wl"], (0, 2, 1))       # (7, 8, 64)
    bl_t = jnp.transpose(params["bl"], (0, 2, 1))       # (7, 8, 1)

    grid = (N_NETS, n_tiles)                             # nets outer, batch inner
    out = pl.pallas_call(
        _make_kernel(approx_gelu),
        out_shape=jax.ShapeDtypeStruct((N_NETS, OUT_PAD, N_pad), jnp.float32),
        grid_spec=pltpu.PrefetchScalarGridSpec(
            num_scalar_prefetch=0,
            grid=grid,
            in_specs=[
                pl.BlockSpec((1, TN), lambda n, i: (0, i)),
                pl.BlockSpec((1, HIDDEN, 1), lambda n, i: (n, 0, 0)),
                pl.BlockSpec((1, HIDDEN, 1), lambda n, i: (n, 0, 0)),
                pl.BlockSpec((1, N_HH, HIDDEN, HIDDEN), lambda n, i: (n, 0, 0, 0)),
                pl.BlockSpec((1, N_HH, HIDDEN, 1), lambda n, i: (n, 0, 0, 0)),
                pl.BlockSpec((1, OUT_PAD, HIDDEN), lambda n, i: (n, 0, 0)),
                pl.BlockSpec((1, OUT_PAD, 1), lambda n, i: (n, 0, 0)),
            ],
            out_specs=pl.BlockSpec((1, OUT_PAD, TN), lambda n, i: (n, 0, i)),
        ),
        compiler_params=pltpu.CompilerParams(
            # Both axes are independent -> megacore sharding on v7x always has
            # >= 7 steps to split; free on v5e/v6e.
            dimension_semantics=("parallel", "parallel")),
    )(t_row, w0_t, b0_t, wh_t, bh_t, wl_t, bl_t)
    return out[:, :, :N]                                  # (7, 8, N)


# ----------------------------- pure-JAX reference ----------------------------

def pitlnn_reference(t, params, *, approx_gelu=False):
    gelu = _gelu_tanh if approx_gelu else _gelu_exact
    t = t.astype(jnp.float32)
    outs = []
    for n in range(N_NETS):
        h = t @ params["w0"][n] + params["b0"][n]
        h = gelu(h)
        for l in range(N_HH):
            h = h @ params["wh"][n, l] + params["bh"][n, l]
            h = gelu(h)
        outs.append(h @ params["wl"][n] + params["bl"][n])
    return jnp.stack(outs)                      # (7, N, 8)


def pitlnn_forward(t, params, *, approx_gelu=False, force_pallas=False):
    """Mirrors PITLNN.forward: returns (y1..y8, r1, r2, r3, r5, r6, r10)."""
    N = t.shape[0]
    if force_pallas or N >= _SMALL_N_FALLBACK:
        out = pitlnn_pallas(t, params, approx_gelu=approx_gelu)   # (7, 8, N)
    else:
        # Tiny batches: the pallas_call launch + slice overhead dominates,
        # use a plain XLA path (same math, same GELU).
        out = jnp.transpose(
            pitlnn_reference(t, params, approx_gelu=approx_gelu), (0, 2, 1))
    y = out[0]                                  # (8, N): net has 8 real outputs
    ys = tuple(y[i][:, None] for i in range(8))
    rs = tuple(out[k, 0][:, None] for k in range(1, 7))
    return ys + rs


# ----------------------------- parameter init -------------------------------

def _linear_init(key, fan_in, fan_out, last):
    kw, kb = jax.random.split(key)
    if last:
        # nn.init.xavier_uniform_ on weight, zeros on bias
        bound = (6.0 / (fan_in + fan_out)) ** 0.5
        w = jax.random.uniform(kw, (fan_in, fan_out), jnp.float32, -bound, bound)
        b = jnp.zeros((fan_out,), jnp.float32)
    else:
        # PyTorch nn.Linear default: U(-1/sqrt(fan_in), 1/sqrt(fan_in))
        bound = 1.0 / (fan_in ** 0.5)
        w = jax.random.uniform(kw, (fan_in, fan_out), jnp.float32, -bound, bound)
        b = jax.random.uniform(kb, (fan_out,), jnp.float32, -bound, bound)
    return w, b


def init_params(key):
    out_dims = [8, 1, 1, 1, 1, 1, 1]   # net, r1, r2, r3, r5, r6, r10
    w0s, b0s, whs, bhs, wls, bls = [], [], [], [], [], []
    for n in range(N_NETS):
        key, k0 = jax.random.split(key)
        w0, b0 = _linear_init(k0, 1, HIDDEN, last=False)
        w0s.append(w0[None])                    # (1, 1, 64)
        b0s.append(b0[None, None])              # (1, 1, 64)
        wh_n, bh_n = [], []
        for _ in range(N_HH):
            key, kh = jax.random.split(key)
            w, b = _linear_init(kh, HIDDEN, HIDDEN, last=False)
            wh_n.append(w)
            bh_n.append(b[None])
        whs.append(jnp.stack(wh_n)[None])       # (1, 6, 64, 64)
        bhs.append(jnp.stack(bh_n)[None])       # (1, 6, 1, 64)
        key, kl = jax.random.split(key)
        d = out_dims[n]
        wl, bl = _linear_init(kl, HIDDEN, d, last=True)
        wl_p = jnp.zeros((HIDDEN, OUT_PAD), jnp.float32).at[:, :d].set(wl)
        bl_p = jnp.zeros((OUT_PAD,), jnp.float32).at[:d].set(bl)
        wls.append(wl_p[None])                  # (1, 64, 8)
        bls.append(bl_p[None, None])            # (1, 1, 8)
    return {
        "w0": jnp.concatenate(w0s), "b0": jnp.concatenate(b0s),
        "wh": jnp.concatenate(whs), "bh": jnp.concatenate(bhs),
        "wl": jnp.concatenate(wls), "bl": jnp.concatenate(bls),
    }


if __name__ == "__main__":
    key = jax.random.PRNGKey(0)
    kp, kt = jax.random.split(key)
    params = init_params(kp)

    N = 8
    t = jax.random.uniform(kt, (N, 1), jnp.float32, 0.0, 1.0)   # e.g. time samples

    # Exact-erf GELU (PyTorch nn.GELU parity) through the Pallas kernel.
    outs = pitlnn_forward(t, params, force_pallas=True)
    outs = jax.block_until_ready(outs)

    ref_full = pitlnn_reference(t, params)      # (7, N, 8)
    y_ref = ref_full[0]
    ref_outs = tuple(y_ref[:, i:i + 1] for i in range(8)) + tuple(
        ref_full[k][:, :1] for k in range(1, 7))
    for got, want in zip(outs, ref_outs):
        assert got.shape == want.shape == (N, 1)
        assert jnp.max(jnp.abs(got - want)) < 2e-4, "mismatch vs reference (exact GELU)"

    # Fast tanh/EUP GELU path: compare against a matching tanh-GELU reference.
    outs_fast = pitlnn_forward(t, params, force_pallas=True, approx_gelu=True)
    outs_fast = jax.block_until_ready(outs_fast)
    ref_fast = pitlnn_reference(t, params, approx_gelu=True)
    y_ref_f = ref_fast[0]
    ref_outs_f = tuple(y_ref_f[:, i:i + 1] for i in range(8)) + tuple(
        ref_fast[k][:, :1] for k in range(1, 7))
    for got, want in zip(outs_fast, ref_outs_f):
        assert jnp.max(jnp.abs(got - want)) < 1e-3, "mismatch vs reference (tanh GELU)"

    print("KERNEL_OK")
</pallas_src>

<mosaic_0001>
module attributes {stable_mosaic.version = 11 : i64} {
  func.func @_pitlnn_kernel(%arg0: i32, %arg1: i32, %arg2: memref<1x128xf32, #tpu.memory_space<vmem>>, %arg3: memref<1x64x1xf32, #tpu.memory_space<vmem>>, %arg4: memref<1x64x1xf32, #tpu.memory_space<vmem>>, %arg5: memref<1x6x64x64xf32, #tpu.memory_space<vmem>>, %arg6: memref<1x6x64x1xf32, #tpu.memory_space<vmem>>, %arg7: memref<1x8x64xf32, #tpu.memory_space<vmem>>, %arg8: memref<1x8x1xf32, #tpu.memory_space<vmem>>, %arg9: memref<1x8x128xf32, #tpu.memory_space<vmem>>) attributes {dimension_semantics = [#tpu.dimension_semantics<parallel>, #tpu.dimension_semantics<parallel>], iteration_bounds = array<i64: 7, 1>, scalar_prefetch = 0 : i64, scratch_operands = 0 : i64, tpu.core_type = #tpu.core_type<tc>, window_params = [{transform_indices = @transform_0, window_bounds = array<i64: 1, 128>}, {transform_indices = @transform_1, window_bounds = array<i64: 1, 64, 1>}, {transform_indices = @transform_2, window_bounds = array<i64: 1, 64, 1>}, {transform_indices = @transform_3, window_bounds = array<i64: 1, 6, 64, 64>}, {transform_indices = @transform_4, window_bounds = array<i64: 1, 6, 64, 1>}, {transform_indices = @transform_5, window_bounds = array<i64: 1, 8, 64>}, {transform_indices = @transform_6, window_bounds = array<i64: 1, 8, 1>}, {transform_indices = @transform_7, window_bounds = array<i64: 1, 8, 128>}]} {
    %c0 = arith.constant 0 : index
    %c0_0 = arith.constant 0 : index
    %0 = vector.load %arg2[%c0, %c0_0] : memref<1x128xf32, #tpu.memory_space<vmem>>, vector<1x128xf32>
    %c0_1 = arith.constant 0 : index
    %c0_2 = arith.constant 0 : index
    %c0_3 = arith.constant 0 : index
    %1 = vector.load %arg3[%c0_1, %c0_2, %c0_3] : memref<1x64x1xf32, #tpu.memory_space<vmem>>, vector<1x64x1xf32>
    %2 = vector.shape_cast %1 : vector<1x64x1xf32> to vector<64x1xf32>
    %3 = vector.broadcast %2 : vector<64x1xf32> to vector<64x128xf32>
    %4 = vector.broadcast %0 : vector<1x128xf32> to vector<64x128xf32>
    %5 = arith.mulf %3, %4 : vector<64x128xf32>
    %c0_4 = arith.constant 0 : index
    %c0_5 = arith.constant 0 : index
    %c0_6 = arith.constant 0 : index
    %6 = vector.load %arg4[%c0_4, %c0_5, %c0_6] : memref<1x64x1xf32, #tpu.memory_space<vmem>>, vector<1x64x1xf32>
    %7 = vector.shape_cast %6 : vector<1x64x1xf32> to vector<64x1xf32>
    %8 = vector.broadcast %7 : vector<64x1xf32> to vector<64x128xf32>
    %9 = arith.addf %5, %8 : vector<64x128xf32>
    %cst = arith.constant 5.000000e-01 : f32
    %10 = vector.broadcast %cst : f32 to vector<64x128xf32>
    %11 = arith.mulf %10, %9 : vector<64x128xf32>
    %cst_7 = arith.constant 0.707106769 : f32
    %12 = vector.broadcast %cst_7 : f32 to vector<64x128xf32>
    %13 = arith.mulf %9, %12 : vector<64x128xf32>
    %14 = math.erf %13 : vector<64x128xf32>
    %cst_8 = arith.constant 1.000000e+00 : f32
    %15 = vector.broadcast %cst_8 : f32 to vector<64x128xf32>
    %16 = arith.addf %15, %14 : vector<64x128xf32>
    %17 = arith.mulf %11, %16 : vector<64x128xf32>
    %c0_9 = arith.constant 0 : index
    %c0_10 = arith.constant 0 : index
    %c0_11 = arith.constant 0 : index
    %c0_12 = arith.constant 0 : index
    %18 = vector.load %arg5[%c0_9, %c0_10, %c0_11, %c0_12] : memref<1x6x64x64xf32, #tpu.memory_space<vmem>>, vector<1x1x64x64xf32>
    %19 = vector.shape_cast %18 : vector<1x1x64x64xf32> to vector<64x64xf32>
    %cst_13 = arith.constant dense<0.000000e+00> : vector<64x128xf32>
    %20 = tpu.matmul %19, %17, %cst_13 {dimension_numbers = #tpu.dot_dimension_numbers<[1], [0], [0], [1], [0, 0, 1, 1], [], []>} : vector<64x64xf32>, vector<64x128xf32>, vector<64x128xf32> -> vector<64x128xf32>
    %c0_14 = arith.constant 0 : index
    %c0_15 = arith.constant 0 : index
    %c0_16 = arith.constant 0 : index
    %c0_17 = arith.constant 0 : index
    %21 = vector.load %arg6[%c0_14, %c0_15, %c0_16, %c0_17] : memref<1x6x64x1xf32, #tpu.memory_space<vmem>>, vector<1x1x64x1xf32>
    %22 = vector.shape_cast %21 : vector<1x1x64x1xf32> to vector<64x1xf32>
    %23 = vector.broadcast %22 : vector<64x1xf32> to vector<64x128xf32>
    %24 = arith.addf %20, %23 : vector<64x128xf32>
    %cst_18 = arith.constant 5.000000e-01 : f32
    %25 = vector.broadcast %cst_18 : f32 to vector<64x128xf32>
    %26 = arith.mulf %25, %24 : vector<64x128xf32>
    %cst_19 = arith.constant 0.707106769 : f32
    %27 = vector.broadcast %cst_19 : f32 to vector<64x128xf32>
    %28 = arith.mulf %24, %27 : vector<64x128xf32>
    %29 = math.erf %28 : vector<64x128xf32>
    %cst_20 = arith.constant 1.000000e+00 : f32
    %30 = vector.broadcast %cst_20 : f32 to vector<64x128xf32>
    %31 = arith.addf %30, %29 : vector<64x128xf32>
    %32 = arith.mulf %26, %31 : vector<64x128xf32>
    %c0_21 = arith.constant 0 : index
    %c1 = arith.constant 1 : index
    %c0_22 = arith.constant 0 : index
    %c0_23 = arith.constant 0 : index
    %33 = vector.load %arg5[%c0_21, %c1, %c0_22, %c0_23] : memref<1x6x64x64xf32, #tpu.memory_space<vmem>>, vector<1x1x64x64xf32>
    %34 = vector.shape_cast %33 : vector<1x1x64x64xf32> to vector<64x64xf32>
    %cst_24 = arith.constant dense<0.000000e+00> : vector<64x128xf32>
    %35 = tpu.matmul %34, %32, %cst_24 {dimension_numbers = #tpu.dot_dimension_numbers<[1], [0], [0], [1], [0, 0, 1, 1], [], []>} : vector<64x64xf32>, vector<64x128xf32>, vector<64x128xf32> -> vector<64x128xf32>
    %c0_25 = arith.constant 0 : index
    %c1_26 = arith.constant 1 : index
    %c0_27 = arith.constant 0 : index
    %c0_28 = arith.constant 0 : index
    %36 = vector.load %arg6[%c0_25, %c1_26, %c0_27, %c0_28] : memref<1x6x64x1xf32, #tpu.memory_space<vmem>>, vector<1x1x64x1xf32>
    %37 = vector.shape_cast %36 : vector<1x1x64x1xf32> to vector<64x1xf32>
    %38 = vector.broadcast %37 : vector<64x1xf32> to vector<64x128xf32>
    %39 = arith.addf %35, %38 : vector<64x128xf32>
    %cst_29 = arith.constant 5.000000e-01 : f32
    %40 = vector.broadcast %cst_29 : f32 to vector<64x128xf32>
    %41 = arith.mulf %40, %39 : vector<64x128xf32>
    %cst_30 = arith.constant 0.707106769 : f32
    %42 = vector.broadcast %cst_30 : f32 to vector<64x128xf32>
    %43 = arith.mulf %39, %42 : vector<64x128xf32>
    %44 = math.erf %43 : vector<64x128xf32>
    %cst_31 = arith.constant 1.000000e+00 : f32
    %45 = vector.broadcast %cst_31 : f32 to vector<64x128xf32>
    %46 = arith.addf %45, %44 : vector<64x128xf32>
    %47 = arith.mulf %41, %46 : vector<64x128xf32>
    %c0_32 = arith.constant 0 : index
    %c2 = arith.constant 2 : index
    %c0_33 = arith.constant 0 : index
    %c0_34 = arith.constant 0 : index
    %48 = vector.load %arg5[%c0_32, %c2, %c0_33, %c0_34] : memref<1x6x64x64xf32, #tpu.memory_space<vmem>>, vector<1x1x64x64xf32>
    %49 = vector.shape_cast %48 : vector<1x1x64x64xf32> to vector<64x64xf32>
    %cst_35 = arith.constant dense<0.000000e+00> : vector<64x128xf32>
    %50 = tpu.matmul %49, %47, %cst_35 {dimension_numbers = #tpu.dot_dimension_numbers<[1], [0], [0], [1], [0, 0, 1, 1], [], []>} : vector<64x64xf32>, vector<64x128xf32>, vector<64x128xf32> -> vector<64x128xf32>
    %c0_36 = arith.constant 0 : index
    %c2_37 = arith.constant 2 : index
    %c0_38 = arith.constant 0 : index
    %c0_39 = arith.constant 0 : index
    %51 = vector.load %arg6[%c0_36, %c2_37, %c0_38, %c0_39] : memref<1x6x64x1xf32, #tpu.memory_space<vmem>>, vector<1x1x64x1xf32>
    %52 = vector.shape_cast %51 : vector<1x1x64x1xf32> to vector<64x1xf32>
    %53 = vector.broadcast %52 : vector<64x1xf32> to vector<64x128xf32>
    %54 = arith.addf %50, %53 : vector<64x128xf32>
    %cst_40 = arith.constant 5.000000e-01 : f32
    %55 = vector.broadcast %cst_40 : f32 to vector<64x128xf32>
    %56 = arith.mulf %55, %54 : vector<64x128xf32>
    %cst_41 = arith.constant 0.707106769 : f32
    %57 = vector.broadcast %cst_41 : f32 to vector<64x128xf32>
    %58 = arith.mulf %54, %57 : vector<64x128xf32>
    %59 = math.erf %58 : vector<64x128xf32>
    %cst_42 = arith.constant 1.000000e+00 : f32
    %60 = vector.broadcast %cst_42 : f32 to vector<64x128xf32>
    %61 = arith.addf %60, %59 : vector<64x128xf32>
    %62 = arith.mulf %56, %61 : vector<64x128xf32>
    %c0_43 = arith.constant 0 : index
    %c3 = arith.constant 3 : index
    %c0_44 = arith.constant 0 : index
    %c0_45 = arith.constant 0 : index
    %63 = vector.load %arg5[%c0_43, %c3, %c0_44, %c0_45] : memref<1x6x64x64xf32, #tpu.memory_space<vmem>>, vector<1x1x64x64xf32>
    %64 = vector.shape_cast %63 : vector<1x1x64x64xf32> to vector<64x64xf32>
    %cst_46 = arith.constant dense<0.000000e+00> : vector<64x128xf32>
    %65 = tpu.matmul %64, %62, %cst_46 {dimension_numbers = #tpu.dot_dimension_numbers<[1], [0], [0], [1], [0, 0, 1, 1], [], []>} : vector<64x64xf32>, vector<64x128xf32>, vector<64x128xf32> -> vector<64x128xf32>
    %c0_47 = arith.constant 0 : index
    %c3_48 = arith.constant 3 : index
    %c0_49 = arith.constant 0 : index
    %c0_50 = arith.constant 0 : index
    %66 = vector.load %arg6[%c0_47, %c3_48, %c0_49, %c0_50] : memref<1x6x64x1xf32, #tpu.memory_space<vmem>>, vector<1x1x64x1xf32>
    %67 = vector.shape_cast %66 : vector<1x1x64x1xf32> to vector<64x1xf32>
    %68 = vector.broadcast %67 : vector<64x1xf32> to vector<64x128xf32>
    %69 = arith.addf %65, %68 : vector<64x128xf32>
    %cst_51 = arith.constant 5.000000e-01 : f32
    %70 = vector.broadcast %cst_51 : f32 to vector<64x128xf32>
    %71 = arith.mulf %70, %69 : vector<64x128xf32>
    %cst_52 = arith.constant 0.707106769 : f32
    %72 = vector.broadcast %cst_52 : f32 to vector<64x128xf32>
    %73 = arith.mulf %69, %72 : vector<64x128xf32>
    %74 = math.erf %73 : vector<64x128xf32>
    %cst_53 = arith.constant 1.000000e+00 : f32
    %75 = vector.broadcast %cst_53 : f32 to vector<64x128xf32>
    %76 = arith.addf %75, %74 : vector<64x128xf32>
    %77 = arith.mulf %71, %76 : vector<64x128xf32>
    %c0_54 = arith.constant 0 : index
    %c4 = arith.constant 4 : index
    %c0_55 = arith.constant 0 : index
    %c0_56 = arith.constant 0 : index
    %78 = vector.load %arg5[%c0_54, %c4, %c0_55, %c0_56] : memref<1x6x64x64xf32, #tpu.memory_space<vmem>>, vector<1x1x64x64xf32>
    %79 = vector.shape_cast %78 : vector<1x1x64x64xf32> to vector<64x64xf32>
    %cst_57 = arith.constant dense<0.000000e+00> : vector<64x128xf32>
    %80 = tpu.matmul %79, %77, %cst_57 {dimension_numbers = #tpu.dot_dimension_numbers<[1], [0], [0], [1], [0, 0, 1, 1], [], []>} : vector<64x64xf32>, vector<64x128xf32>, vector<64x128xf32> -> vector<64x128xf32>
    %c0_58 = arith.constant 0 : index
    %c4_59 = arith.constant 4 : index
    %c0_60 = arith.constant 0 : index
    %c0_61 = arith.constant 0 : index
    %81 = vector.load %arg6[%c0_58, %c4_59, %c0_60, %c0_61] : memref<1x6x64x1xf32, #tpu.memory_space<vmem>>, vector<1x1x64x1xf32>
    %82 = vector.shape_cast %81 : vector<1x1x64x1xf32> to vector<64x1xf32>
    %83 = vector.broadcast %82 : vector<64x1xf32> to vector<64x128xf32>
    %84 = arith.addf %80, %83 : vector<64x128xf32>
    %cst_62 = arith.constant 5.000000e-01 : f32
    %85 = vector.broadcast %cst_62 : f32 to vector<64x128xf32>
    %86 = arith.mulf %85, %84 : vector<64x128xf32>
    %cst_63 = arith.constant 0.707106769 : f32
    %87 = vector.broadcast %cst_63 : f32 to vector<64x128xf32>
    %88 = arith.mulf %84, %87 : vector<64x128xf32>
    %89 = math.erf %88 : vector<64x128xf32>
    %cst_64 = arith.constant 1.000000e+00 : f32
    %90 = vector.broadcast %cst_64 : f32 to vector<64x128xf32>
    %91 = arith.addf %90, %89 : vector<64x128xf32>
    %92 = arith.mulf %86, %91 : vector<64x128xf32>
    %c0_65 = arith.constant 0 : index
    %c5 = arith.constant 5 : index
    %c0_66 = arith.constant 0 : index
    %c0_67 = arith.constant 0 : index
    %93 = vector.load %arg5[%c0_65, %c5, %c0_66, %c0_67] : memref<1x6x64x64xf32, #tpu.memory_space<vmem>>, vector<1x1x64x64xf32>
    %94 = vector.shape_cast %93 : vector<1x1x64x64xf32> to vector<64x64xf32>
    %cst_68 = arith.constant dense<0.000000e+00> : vector<64x128xf32>
    %95 = tpu.matmul %94, %92, %cst_68 {dimension_numbers = #tpu.dot_dimension_numbers<[1], [0], [0], [1], [0, 0, 1, 1], [], []>} : vector<64x64xf32>, vector<64x128xf32>, vector<64x128xf32> -> vector<64x128xf32>
    %c0_69 = arith.constant 0 : index
    %c5_70 = arith.constant 5 : index
    %c0_71 = arith.constant 0 : index
    %c0_72 = arith.constant 0 : index
    %96 = vector.load %arg6[%c0_69, %c5_70, %c0_71, %c0_72] : memref<1x6x64x1xf32, #tpu.memory_space<vmem>>, vector<1x1x64x1xf32>
    %97 = vector.shape_cast %96 : vector<1x1x64x1xf32> to vector<64x1xf32>
    %98 = vector.broadcast %97 : vector<64x1xf32> to vector<64x128xf32>
    %99 = arith.addf %95, %98 : vector<64x128xf32>
    %cst_73 = arith.constant 5.000000e-01 : f32
    %100 = vector.broadcast %cst_73 : f32 to vector<64x128xf32>
    %101 = arith.mulf %100, %99 : vector<64x128xf32>
    %cst_74 = arith.constant 0.707106769 : f32
    %102 = vector.broadcast %cst_74 : f32 to vector<64x128xf32>
    %103 = arith.mulf %99, %102 : vector<64x128xf32>
    %104 = math.erf %103 : vector<64x128xf32>
    %cst_75 = arith.constant 1.000000e+00 : f32
    %105 = vector.broadcast %cst_75 : f32 to vector<64x128xf32>
    %106 = arith.addf %105, %104 : vector<64x128xf32>
    %107 = arith.mulf %101, %106 : vector<64x128xf32>
    %c0_76 = arith.constant 0 : index
    %c0_77 = arith.constant 0 : index
    %c0_78 = arith.constant 0 : index
    %108 = vector.load %arg7[%c0_76, %c0_77, %c0_78] : memref<1x8x64xf32, #tpu.memory_space<vmem>>, vector<1x8x64xf32>
    %109 = vector.shape_cast %108 : vector<1x8x64xf32> to vector<8x64xf32>
    %cst_79 = arith.constant dense<0.000000e+00> : vector<8x128xf32>
    %110 = tpu.matmul %109, %107, %cst_79 {dimension_numbers = #tpu.dot_dimension_numbers<[1], [0], [0], [1], [0, 0, 1, 1], [], []>} : vector<8x64xf32>, vector<64x128xf32>, vector<8x128xf32> -> vector<8x128xf32>
    %c0_80 = arith.constant 0 : index
    %c0_81 = arith.constant 0 : index
    %c0_82 = arith.constant 0 : index
    %111 = vector.load %arg8[%c0_80, %c0_81, %c0_82] : memref<1x8x1xf32, #tpu.memory_space<vmem>>, vector<1x8x1xf32>
    %112 = vector.shape_cast %111 : vector<1x8x1xf32> to vector<8x1xf32>
    %113 = vector.broadcast %112 : vector<8x1xf32> to vector<8x128xf32>
    %114 = arith.addf %110, %113 : vector<8x128xf32>
    %c0_83 = arith.constant 0 : index
    %c0_84 = arith.constant 0 : index
    %c0_85 = arith.constant 0 : index
    %115 = vector.load %arg9[%c0_83, %c0_84, %c0_85] : memref<1x8x128xf32, #tpu.memory_space<vmem>>, vector<1x8x128xf32>
    %116 = vector.shape_cast %115 : vector<1x8x128xf32> to vector<8x128xf32>
    %117 = vector.shape_cast %114 : vector<8x128xf32> to vector<1x8x128xf32>
    tpu.vector_store %arg9[%c0_83, %c0_84, %c0_85], %117 {strides = array<i32>} : memref<1x8x128xf32, #tpu.memory_space<vmem>>, vector<1x8x128xf32>,
    return
  }
  func.func @transform_0(%arg0: i32, %arg1: i32) -> (i32, i32) {
    %c0_i32 = arith.constant 0 : i32
    %c0_i32_0 = arith.constant 0 : i32
    return %c0_i32, %arg1 : i32, i32
  }
  func.func @transform_1(%arg0: i32, %arg1: i32) -> (i32, i32, i32) {
    %c0_i32 = arith.constant 0 : i32
    %c0_i32_0 = arith.constant 0 : i32
    %c0_i32_1 = arith.constant 0 : i32
    return %arg0, %c0_i32, %c0_i32_0 : i32, i32, i32
  }
  func.func @transform_2(%arg0: i32, %arg1: i32) -> (i32, i32, i32) {
    %c0_i32 = arith.constant 0 : i32
    %c0_i32_0 = arith.constant 0 : i32
    %c0_i32_1 = arith.constant 0 : i32
    return %arg0, %c0_i32, %c0_i32_0 : i32, i32, i32
  }
  func.func @transform_3(%arg0: i32, %arg1: i32) -> (i32, i32, i32, i32) {
    %c0_i32 = arith.constant 0 : i32
    %c0_i32_0 = arith.constant 0 : i32
    %c0_i32_1 = arith.constant 0 : i32
    %c0_i32_2 = arith.constant 0 : i32
    return %arg0, %c0_i32, %c0_i32_0, %c0_i32_1 : i32, i32, i32, i32
  }
  func.func @transform_4(%arg0: i32, %arg1: i32) -> (i32, i32, i32, i32) {
    %c0_i32 = arith.constant 0 : i32
    %c0_i32_0 = arith.constant 0 : i32
    %c0_i32_1 = arith.constant 0 : i32
    %c0_i32_2 = arith.constant 0 : i32
    return %arg0, %c0_i32, %c0_i32_0, %c0_i32_1 : i32, i32, i32, i32
  }
  func.func @transform_5(%arg0: i32, %arg1: i32) -> (i32, i32, i32) {
    %c0_i32 = arith.constant 0 : i32
    %c0_i32_0 = arith.constant 0 : i32
    %c0_i32_1 = arith.constant 0 : i32
    return %arg0, %c0_i32, %c0_i32_0 : i32, i32, i32
  }
  func.func @transform_6(%arg0: i32, %arg1: i32) -> (i32, i32, i32) {
    %c0_i32 = arith.constant 0 : i32
    %c0_i32_0 = arith.constant 0 : i32
    %c0_i32_1 = arith.constant 0 : i32
    return %arg0, %c0_i32, %c0_i32_0 : i32, i32, i32
  }
  func.func @transform_7(%arg0: i32, %arg1: i32) -> (i32, i32, i32) {
    %c0_i32 = arith.constant 0 : i32
    %c0_i32_0 = arith.constant 0 : i32
    return %arg0, %c0_i32, %arg1 : i32, i32, i32
  }
}

</mosaic_0001>

<llo_original>
// kernel: tpu_custom_call.1
$region0: #{tpu_custom_call.1}
  #allocation0 [shape = 'u32[]', space=smem, size = 0x4, offset = 0x4, fixed_abs, tag = 'smem constant byte address 0x4 - core index']
  #allocation1 [shape = 'u32[144,128]{1,0:T(1,128)}', space=vmem, size = 0x12000, scoped, tag = 'internal scratch']
  %s0 = inlined_call_operand.vmem [shape: f32[1,128], index: 0, kind: input, shape index: {}]
  %s1 = inlined_call_operand.vmem [shape: f32[7,64,1], index: 1, kind: input, shape index: {}]
  %s2 = inlined_call_operand.vmem [shape: f32[7,64,1], index: 2, kind: input, shape index: {}]
  %s3 = inlined_call_operand.vmem [shape: f32[7,6,64,64], index: 3, kind: input, shape index: {}]
  %s4 = inlined_call_operand.vmem [shape: f32[7,6,64,1], index: 4, kind: input, shape index: {}]
  %s5 = inlined_call_operand.vmem [shape: f32[7,8,64], index: 5, kind: input, shape index: {}]
  %s6 = inlined_call_operand.vmem [shape: f32[7,8,1], index: 6, kind: input, shape index: {}]
  %s7 = inlined_call_operand.hbm [shape: f32[7,8,128], index: 7, kind: output, shape index: {}]
  %s8 = sld [smem:[#allocation0]]
  $region61: #{tpu_custom_call.1} parent=0
    _
  %s10 = ssub.s32 1, %s8
  %s11 = scalar_select 0, %s10, %s8
  $region1: #{tpu_custom_call.1} parent=0
    #allocation2 [shape = 'u8[8192]{0}', space=vmem, size = 0x2000, scoped, tag = 'output window, operand 0']
    #allocation3 [shape = 's32[2]{0}', space=sflag, size = 0x8, scoped, tag = 'scoped memory for tpu_custom_call.1']
    %12 = vsyncpa [#allocation3], 0
    %s13 = scalar_lea.sflag [#allocation3], 1
    %14 = vsyncpa %s13, 0
    loop: start=0, step=1, limit=9
    $region2: #{tpu_custom_call.1} parent=1 // loop_pre_header
      _
    $region3: #{tpu_custom_call.1} parent=1 // loop_header
      %s16 = sphi 0, %s20
      %p17 = scmp.ge.s32.totalorder %s16, 9
      %s23 = sphi 0, %s35
      %s24 = sphi 0, %s31
      %s25 = sphi 0, %s23
      %s26 = sphi 0, %s24
      %s27 = sphi 0, %s25
      %s28 = sphi 0, %s26
      %s38 = sphi 0, %s40
      %s41 = sphi 0, %s38
      %s42 = sphi 0, %s41
      %s58 = sphi 0, %s42
      %s64 = sphi 0, %s66
      %s67 = sphi 0, %s64
      %s68 = sphi 0, %s67
      %s84 = sphi 0, %s68
      %s90 = sphi 0, %s92
      %s93 = sphi 0, %s90
      %s94 = sphi 0, %s93
      %s110 = sphi 0, %s94
      %s116 = sphi 0, %s118
      %s119 = sphi 0, %s116
      %s120 = sphi 0, %s119
      %s136 = sphi 0, %s120
      %s142 = sphi 0, %s144
      %s145 = sphi 0, %s142
      %s146 = sphi 0, %s145
      %s162 = sphi 0, %s146
      %s168 = sphi 0, %s170
      %s171 = sphi 0, %s168
      %s172 = sphi 0, %s171
      %s188 = sphi 0, %s172
      %s194 = sphi 0, %s196
      %s197 = sphi 0, %s194
      %s198 = sphi 0, %s197
      %s214 = sphi 0, %s198
      %s222 = sphi 0, %s224
      %s225 = sphi 0, %s222
      %s226 = sphi 0, %s225
      %s242 = sphi 0, %s226
    $region4: #{tpu_custom_call.1} parent=1 // loop_header_branch
      %19 = sbr.rel (%p17) target = $region8
    $region5: #{tpu_custom_call.1} parent=1 // loop_body
      %s21 = ssub.s32 %s16, 1
      %s22 = ssub.s32 %s16, 2
      %s29 = sadd.s32 1, %s24
      %p30 = scmp.ge.s32.totalorder %s29, 1
      %s31 = scalar_select %p30, 0, %s29
      %s32 = sadd.s32 1, %s23
      %s33 = scalar_select %p30, %s32, %s23
      %p34 = scmp.ge.s32.totalorder %s33, 7
      %s35 = scalar_select %p34, 0, %s33
      %s36 = ssub.s32 %s24, %s31
      %p37 = scmp.eq.s32.totalorder %s36, 0
      %s39 = sadd.s32 %s38, 1
      %s40 = scalar_select %p37, %s38, %s39
      %p43 = pneg %p37
      %p44 = scmp.eq.s32.totalorder %s16, 6
      %p45 = por %p43, %p44
      %p46 = scmp.ne.s32.totalorder %s38, %s41
      %p47 = scmp.eq.s32.totalorder %s16, 0
      %p48 = por %p46, %p47
      %p49 = scmp.ne.s32.totalorder %s38, %s41
      %p50 = scmp.eq.s32.totalorder %s21, 6
      %p51 = por %p49, %p50
      %p52 = scmp.ne.s32.totalorder %s41, %s42
      %p53 = scmp.eq.s32.totalorder %s21, 0
      %p54 = por %p52, %p53
      %p55 = scmp.ne.s32.totalorder %s41, %s42
      %p56 = scmp.eq.s32.totalorder %s22, 6
      %p57 = por %p55, %p56
      %p59 = scmp.ne.s32.totalorder %s42, %s58
      %p60 = scmp.eq.s32.totalorder %s22, 0
      %p61 = por %p59, %p60
      %s62 = ssub.s32 %s23, %s35
      %p63 = scmp.eq.s32.totalorder %s62, 0
      %s65 = sadd.s32 %s64, 1
      %s66 = scalar_select %p63, %s64, %s65
      %p69 = pneg %p63
      %p70 = scmp.eq.s32.totalorder %s16, 6
      %p71 = por %p69, %p70
      %p72 = scmp.ne.s32.totalorder %s64, %s67
      %p73 = scmp.eq.s32.totalorder %s16, 0
      %p74 = por %p72, %p73
      %p75 = scmp.ne.s32.totalorder %s64, %s67
      %p76 = scmp.eq.s32.totalorder %s21, 6
      %p77 = por %p75, %p76
      %p78 = scmp.ne.s32.totalorder %s67, %s68
      %p79 = scmp.eq.s32.totalorder %s21, 0
      %p80 = por %p78, %p79
      %p81 = scmp.ne.s32.totalorder %s67, %s68
      %p82 = scmp.eq.s32.totalorder %s22, 6
      %p83 = por %p81, %p82
      %p85 = scmp.ne.s32.totalorder %s68, %s84
      %p86 = scmp.eq.s32.totalorder %s22, 0
      %p87 = por %p85, %p86
      %s88 = ssub.s32 %s23, %s35
      %p89 = scmp.eq.s32.totalorder %s88, 0
      %s91 = sadd.s32 %s90, 1
      %s92 = scalar_select %p89, %s90, %s91
      %p95 = pneg %p89
      %p96 = scmp.eq.s32.totalorder %s16, 6
      %p97 = por %p95, %p96
      %p98 = scmp.ne.s32.totalorder %s90, %s93
      %p99 = scmp.eq.s32.totalorder %s16, 0
      %p100 = por %p98, %p99
      %p101 = scmp.ne.s32.totalorder %s90, %s93
      %p102 = scmp.eq.s32.totalorder %s21, 6
      %p103 = por %p101, %p102
      %p104 = scmp.ne.s32.totalorder %s93, %s94
      %p105 = scmp.eq.s32.totalorder %s21, 0
      %p106 = por %p104, %p105
      %p107 = scmp.ne.s32.totalorder %s93, %s94
      %p108 = scmp.eq.s32.totalorder %s22, 6
      %p109 = por %p107, %p108
      %p111 = scmp.ne.s32.totalorder %s94, %s110
      %p112 = scmp.eq.s32.totalorder %s22, 0
      %p113 = por %p111, %p112
      %s114 = ssub.s32 %s23, %s35
      %p115 = scmp.eq.s32.totalorder %s114, 0
      %s117 = sadd.s32 %s116, 1
      %s118 = scalar_select %p115, %s116, %s117
      %p121 = pneg %p115
      %p122 = scmp.eq.s32.totalorder %s16, 6
      %p123 = por %p121, %p122
      %p124 = scmp.ne.s32.totalorder %s116, %s119
      %p125 = scmp.eq.s32.totalorder %s16, 0
      %p126 = por %p124, %p125
      %p127 = scmp.ne.s32.totalorder %s116, %s119
      %p128 = scmp.eq.s32.totalorder %s21, 6
      %p129 = por %p127, %p128
      %p130 = scmp.ne.s32.totalorder %s119, %s120
      %p131 = scmp.eq.s32.totalorder %s21, 0
      %p132 = por %p130, %p131
      %p133 = scmp.ne.s32.totalorder %s119, %s120
      %p134 = scmp.eq.s32.totalorder %s22, 6
      %p135 = por %p133, %p134
      %p137 = scmp.ne.s32.totalorder %s120, %s136
      %p138 = scmp.eq.s32.totalorder %s22, 0
      %p139 = por %p137, %p138
      %s140 = ssub.s32 %s23, %s35
      %p141 = scmp.eq.s32.totalorder %s140, 0
      %s143 = sadd.s32 %s142, 1
      %s144 = scalar_select %p141, %s142, %s143
      %p147 = pneg %p141
      %p148 = scmp.eq.s32.totalorder %s16, 6
      %p149 = por %p147, %p148
      %p150 = scmp.ne.s32.totalorder %s142, %s145
      %p151 = scmp.eq.s32.totalorder %s16, 0
      %p152 = por %p150, %p151
      %p153 = scmp.ne.s32.totalorder %s142, %s145
      %p154 = scmp.eq.s32.totalorder %s21, 6
      %p155 = por %p153, %p154
      %p156 = scmp.ne.s32.totalorder %s145, %s146
      %p157 = scmp.eq.s32.totalorder %s21, 0
      %p158 = por %p156, %p157
      %p159 = scmp.ne.s32.totalorder %s145, %s146
      %p160 = scmp.eq.s32.totalorder %s22, 6
      %p161 = por %p159, %p160
      %p163 = scmp.ne.s32.totalorder %s146, %s162
      %p164 = scmp.eq.s32.totalorder %s22, 0
      %p165 = por %p163, %p164
      %s166 = ssub.s32 %s23, %s35
      %p167 = scmp.eq.s32.totalorder %s166, 0
      %s169 = sadd.s32 %s168, 1
      %s170 = scalar_select %p167, %s168, %s169
      %p173 = pneg %p167
      %p174 = scmp.eq.s32.totalorder %s16, 6
      %p175 = por %p173, %p174
      %p176 = scmp.ne.s32.totalorder %s168, %s171
      %p177 = scmp.eq.s32.totalorder %s16, 0
      %p178 = por %p176, %p177
      %p179 = scmp.ne.s32.totalorder %s168, %s171
      %p180 = scmp.eq.s32.totalorder %s21, 6
      %p181 = por %p179, %p180
      %p182 = scmp.ne.s32.totalorder %s171, %s172
      %p183 = scmp.eq.s32.totalorder %s21, 0
      %p184 = por %p182, %p183
      %p185 = scmp.ne.s32.totalorder %s171, %s172
      %p186 = scmp.eq.s32.totalorder %s22, 6
      %p187 = por %p185, %p186
      %p189 = scmp.ne.s32.totalorder %s172, %s188
      %p190 = scmp.eq.s32.totalorder %s22, 0
      %p191 = por %p189, %p190
      %s192 = ssub.s32 %s23, %s35
      %p193 = scmp.eq.s32.totalorder %s192, 0
      %s195 = sadd.s32 %s194, 1
      %s196 = scalar_select %p193, %s194, %s195
      %p199 = pneg %p193
      %p200 = scmp.eq.s32.totalorder %s16, 6
      %p201 = por %p199, %p200
      %p202 = scmp.ne.s32.totalorder %s194, %s197
      %p203 = scmp.eq.s32.totalorder %s16, 0
      %p204 = por %p202, %p203
      %p205 = scmp.ne.s32.totalorder %s194, %s197
      %p206 = scmp.eq.s32.totalorder %s21, 6
      %p207 = por %p205, %p206
      %p208 = scmp.ne.s32.totalorder %s197, %s198
      %p209 = scmp.eq.s32.totalorder %s21, 0
      %p210 = por %p208, %p209
      %p211 = scmp.ne.s32.totalorder %s197, %s198
      %p212 = scmp.eq.s32.totalorder %s22, 6
      %p213 = por %p211, %p212
      %p215 = scmp.ne.s32.totalorder %s198, %s214
      %p216 = scmp.eq.s32.totalorder %s22, 0
      %p217 = por %p215, %p216
      %s218 = ssub.s32 %s23, %s35
      %s219 = ssub.s32 %s24, %s31
      %s220 = sor.u32 %s218, %s219
      %p221 = scmp.eq.s32.totalorder %s220, 0
      %s223 = sadd.s32 %s222, 1
      %s224 = scalar_select %p221, %s222, %s223
      %p227 = pneg %p221
      %p228 = scmp.eq.s32.totalorder %s16, 6
      %p229 = por %p227, %p228
      %p230 = scmp.ne.s32.totalorder %s222, %s225
      %p231 = scmp.eq.s32.totalorder %s16, 0
      %p232 = por %p230, %p231
      %p233 = scmp.ne.s32.totalorder %s222, %s225
      %p234 = scmp.eq.s32.totalorder %s21, 6
      %p235 = por %p233, %p234
      %p236 = scmp.ne.s32.totalorder %s225, %s226
      %p237 = scmp.eq.s32.totalorder %s21, 0
      %p238 = por %p236, %p237
      %p239 = scmp.ne.s32.totalorder %s225, %s226
      %p240 = scmp.eq.s32.totalorder %s22, 6
      %p241 = por %p239, %p240
      %p243 = scmp.ne.s32.totalorder %s226, %s242
      %p244 = scmp.eq.s32.totalorder %s22, 0
      %p245 = por %p243, %p244
      %p246 = scmp.le.s32.totalorder 1, %s16
      %p247 = scmp.lt.s32.totalorder %s16, 8
      %p248 = pnand %p246, %p247
      %p249 = pneg %p248
      // Predicated region
      $region9: #{tpu_custom_call.1} parent=5 // pred_check
        _
      $region10: #{tpu_custom_call.1} parent=5 // pred_check_branch
        %251 = sbr.rel (%p248) target = $region12
      $region11: #{tpu_custom_call.1} parent=5 // pred_region
        %s252 = ssub.s32 %s16, 1
        // Predicated region
        $region13: #{tpu_custom_call.1} parent=11 // pred_check
          %p253 = pneg %p54
        $region14: #{tpu_custom_call.1} parent=11 // pred_check_branch
          %255 = sbr.rel (%p253) target = $region16
        $region15: #{tpu_custom_call.1} parent=11 // pred_region
          %p256 = scmp.lt.s32.totalorder %s26, 0
          %s257 = scalar_select %p256, %s26, 0
          %s258 = scalar_lea.vmem %s0, %s257
        $region16: #{tpu_custom_call.1} parent=11 // pred_fallthru
          _
      $region12: #{tpu_custom_call.1} parent=5 // pred_fallthru
        _
      %p259 = scmp.lt.s32.totalorder %s16, 7
      // Predicated region
      $region17: #{tpu_custom_call.1} parent=5 // pred_check
        %p260 = pneg %p259
      $region18: #{tpu_custom_call.1} parent=5 // pred_check_branch
        %262 = sbr.rel (%p260) target = $region20
      $region19: #{tpu_custom_call.1} parent=5 // pred_region
        // Predicated region
        $region21: #{tpu_custom_call.1} parent=19 // pred_check
          %p263 = pneg %p74
        $region22: #{tpu_custom_call.1} parent=19 // pred_check_branch
          %265 = sbr.rel (%p263) target = $region24
        $region23: #{tpu_custom_call.1} parent=19 // pred_region
          %p266 = scmp.lt.s32.totalorder %s23, 6
          %s267 = scalar_select %p266, %s23, 6
          %s268 = smul.addr %s267, 8
          %s269 = smul.addr %s268, 8
          %s270 = scalar_lea.vmem %s1, %s269
        $region24: #{tpu_custom_call.1} parent=19 // pred_fallthru
          _
        // Predicated region
        $region25: #{tpu_custom_call.1} parent=19 // pred_check
          %p271 = pneg %p100
        $region26: #{tpu_custom_call.1} parent=19 // pred_check_branch
          %273 = sbr.rel (%p271) target = $region28
        $region27: #{tpu_custom_call.1} parent=19 // pred_region
          %p274 = scmp.lt.s32.totalorder %s23, 6
          %s275 = scalar_select %p274, %s23, 6
          %s276 = smul.addr %s275, 8
          %s277 = smul.addr %s276, 8
          %s278 = scalar_lea.vmem %s2, %s277
        $region28: #{tpu_custom_call.1} parent=19 // pred_fallthru
          _
        // Predicated region
        $region29: #{tpu_custom_call.1} parent=19 // pred_check
          %p279 = pneg %p126
        $region30: #{tpu_custom_call.1} parent=19 // pred_check_branch
          %281 = sbr.rel (%p279) target = $region32
        $region31: #{tpu_custom_call.1} parent=19 // pred_region
          %p282 = scmp.lt.s32.totalorder %s23, 6
          %s283 = scalar_select %p282, %s23, 6
          %s284 = smul.addr %s283, 48
          %s285 = smul.addr %s284, 8
          %s286 = scalar_lea.vmem %s3, %s285
        $region32: #{tpu_custom_call.1} parent=19 // pred_fallthru
          _
        // Predicated region
        $region33: #{tpu_custom_call.1} parent=19 // pred_check
          %p287 = pneg %p152
        $region34: #{tpu_custom_call.1} parent=19 // pred_check_branch
          %289 = sbr.rel (%p287) target = $region36
        $region35: #{tpu_custom_call.1} parent=19 // pred_region
          %p290 = scmp.lt.s32.totalorder %s23, 6
          %s291 = scalar_select %p290, %s23, 6
          %s292 = smul.addr %s291, 48
          %s293 = smul.addr %s292, 8
          %s294 = scalar_lea.vmem %s4, %s293
        $region36: #{tpu_custom_call.1} parent=19 // pred_fallthru
          _
        // Predicated region
        $region37: #{tpu_custom_call.1} parent=19 // pred_check
          %p295 = pneg %p178
        $region38: #{tpu_custom_call.1} parent=19 // pred_check_branch
          %297 = sbr.rel (%p295) target = $region40
        $region39: #{tpu_custom_call.1} parent=19 // pred_region
          %p298 = scmp.lt.s32.totalorder %s23, 6
          %s299 = scalar_select %p298, %s23, 6
          %s300 = smul.addr %s299, 8
          %s301 = scalar_lea.vmem %s5, %s300
        $region40: #{tpu_custom_call.1} parent=19 // pred_fallthru
          _
        // Predicated region
        $region41: #{tpu_custom_call.1} parent=19 // pred_check
          %p302 = pneg %p204
        $region42: #{tpu_custom_call.1} parent=19 // pred_check_branch
          %304 = sbr.rel (%p302) target = $region44
        $region43: #{tpu_custom_call.1} parent=19 // pred_region
          %p305 = scmp.lt.s32.totalorder %s23, 6
          %s306 = scalar_select %p305, %s23, 6
          %s307 = smul.addr %s306, 8
          %s308 = scalar_lea.vmem %s6, %s307
        $region44: #{tpu_custom_call.1} parent=19 // pred_fallthru
          _
      $region20: #{tpu_custom_call.1} parent=5 // pred_fallthru
        _
      %p309 = scmp.le.s32.totalorder 1, %s16
      %p310 = scmp.lt.s32.totalorder %s16, 8
      %p311 = pnand %p309, %p310
      %p312 = pneg %p311
      // Predicated region
      $region45: #{tpu_custom_call.1} parent=5 // pred_check
        _
      $region46: #{tpu_custom_call.1} parent=5 // pred_check_branch
        %314 = sbr.rel (%p311) target = $region48
      $region47: #{tpu_custom_call.1} parent=5 // pred_region
        %s315 = ssub.s32 %s16, 1
        %p316 = scmp.lt.s32.totalorder %s26, 0
        %s317 = scalar_select %p316, %s26, 0
        %s318 = scalar_lea.vmem %s0, %s317
        %p319 = pneg %p54
        %p320 = pneg %p51
        %p321 = scmp.lt.s32.totalorder %s25, 6
        %s322 = scalar_select %p321, %s25, 6
        %s323 = smul.addr %s322, 8
        %s324 = smul.addr %s323, 8
        %s325 = scalar_lea.vmem %s1, %s324
        %p326 = pneg %p80
        %p327 = pneg %p77
        %p328 = scmp.lt.s32.totalorder %s25, 6
        %s329 = scalar_select %p328, %s25, 6
        %s330 = smul.addr %s329, 8
        %s331 = smul.addr %s330, 8
        %s332 = scalar_lea.vmem %s2, %s331
        %p333 = pneg %p106
        %p334 = pneg %p103
        %p335 = scmp.lt.s32.totalorder %s25, 6
        %s336 = scalar_select %p335, %s25, 6
        %s337 = smul.addr %s336, 48
        %s338 = smul.addr %s337, 8
        %s339 = scalar_lea.vmem %s3, %s338
        %p340 = pneg %p132
        %p341 = pneg %p129
        %p342 = scmp.lt.s32.totalorder %s25, 6
        %s343 = scalar_select %p342, %s25, 6
        %s344 = smul.addr %s343, 48
        %s345 = smul.addr %s344, 8
        %s346 = scalar_lea.vmem %s4, %s345
        %p347 = pneg %p158
        %p348 = pneg %p155
        %p349 = scmp.lt.s32.totalorder %s25, 6
        %s350 = scalar_select %p349, %s25, 6
        %s351 = smul.addr %s350, 8
        %s352 = scalar_lea.vmem %s5, %s351
        %p353 = pneg %p184
        %p354 = pneg %p181
        %p355 = scmp.lt.s32.totalorder %s25, 6
        %s356 = scalar_select %p355, %s25, 6
        %s357 = smul.addr %s356, 8
        %s358 = scalar_lea.vmem %s6, %s357
        %p359 = pneg %p210
        %p360 = pneg %p207
        %p361 = pneg %p238
        %p362 = pneg %p235
        %s363 = sand.u32 %s225, 1
        %s364 = scalar_lea.sflag [#allocation3], %s363
        %s365 = sand.u32 %s225, 1
        %s366 = smul.addr %s365, 8
        %s367 = scalar_lea.vmem [#allocation2], %s366
        %p368 = scmp.lt.s32.totalorder %s26, 0
        %s369 = scalar_select %p368, %s26, 0
        %s370 = scalar_lea.vmem %s0, %s369
        %p371 = scmp.lt.s32.totalorder %s25, 6
        %s372 = scalar_select %p371, %s25, 6
        %s373 = smul.addr %s372, 8
        %s374 = smul.addr %s373, 8
        %s375 = scalar_lea.vmem %s1, %s374
        %p376 = scmp.lt.s32.totalorder %s25, 6
        %s377 = scalar_select %p376, %s25, 6
        %s378 = smul.addr %s377, 8
        %s379 = smul.addr %s378, 8
        %s380 = scalar_lea.vmem %s2, %s379
        %p381 = scmp.lt.s32.totalorder %s25, 6
        %s382 = scalar_select %p381, %s25, 6
        %s383 = smul.addr %s382, 48
        %s384 = smul.addr %s383, 8
        %s385 = scalar_lea.vmem %s3, %s384
        %p386 = scmp.lt.s32.totalorder %s25, 6
        %s387 = scalar_select %p386, %s25, 6
        %s388 = smul.addr %s387, 48
        %s389 = smul.addr %s388, 8
        %s390 = scalar_lea.vmem %s4, %s389
        %p391 = scmp.lt.s32.totalorder %s25, 6
        %s392 = scalar_select %p391, %s25, 6
        %s393 = smul.addr %s392, 8
        %s394 = scalar_lea.vmem %s5, %s393
        %p395 = scmp.lt.s32.totalorder %s25, 6
        %s396 = scalar_select %p395, %s25, 6
        %s397 = smul.addr %s396, 8
        %s398 = scalar_lea.vmem %s6, %s397
        %v399 = vld [vmem:[%s370] sm:$0x1]
        %v400 = vld [vmem:[%s375] sm:$0xff]
        %v401 = vld [vmem:[%s375 + $0x8] sm:$0xff]
        %v402 = vld [vmem:[%s375 + $0x10] sm:$0xff]
        %v403 = vld [vmem:[%s375 + $0x18] sm:$0xff]
        %v404 = vld [vmem:[%s375 + $0x20] sm:$0xff]
        %v405 = vld [vmem:[%s375 + $0x28] sm:$0xff]
        %v406 = vld [vmem:[%s375 + $0x30] sm:$0xff]
        %v407 = vld [vmem:[%s375 + $0x38] sm:$0xff]
        %409 = vset.pattern.permute.xlu0 0
        %410 = vperm.xlu0 %409, %v400
        %v411 = vpop.permute.xlu0 %410
        %414 = vset.pattern.permute.xlu0 0
        %415 = vperm.xlu0 %414, %v401
        %v416 = vpop.permute.xlu0 %415
        %419 = vset.pattern.permute.xlu0 0
        %420 = vperm.xlu0 %419, %v402
        %v421 = vpop.permute.xlu0 %420
        %424 = vset.pattern.permute.xlu0 0
        %425 = vperm.xlu0 %424, %v403
        %v426 = vpop.permute.xlu0 %425
        %429 = vset.pattern.permute.xlu0 0
        %430 = vperm.xlu0 %429, %v404
        %v431 = vpop.permute.xlu0 %430
        %434 = vset.pattern.permute.xlu0 0
        %435 = vperm.xlu0 %434, %v405
        %v436 = vpop.permute.xlu0 %435
        %439 = vset.pattern.permute.xlu0 0
        %440 = vperm.xlu0 %439, %v406
        %v441 = vpop.permute.xlu0 %440
        %444 = vset.pattern.permute.xlu0 0
        %445 = vperm.xlu0 %444, %v407
        %v446 = vpop.permute.xlu0 %445
        %v449 = vlaneseq
        %v450 = vshrl.u32 %v449, 7
        %v451 = vsub.s32 0, %v450
        %v452 = vrot.slane %v399, %v451
        %v454 = vmul.f32 %v411, %v452
        %v455 = vmul.f32 %v416, %v452
        %v456 = vmul.f32 %v421, %v452
        %v457 = vmul.f32 %v426, %v452
        %v458 = vmul.f32 %v431, %v452
        %v459 = vmul.f32 %v436, %v452
        %v460 = vmul.f32 %v441, %v452
        %v461 = vmul.f32 %v446, %v452
        %v462 = vld [vmem:[%s380] sm:$0xff]
        %v463 = vld [vmem:[%s380 + $0x8] sm:$0xff]
        %v464 = vld [vmem:[%s380 + $0x10] sm:$0xff]
        %v465 = vld [vmem:[%s380 + $0x18] sm:$0xff]
        %v466 = vld [vmem:[%s380 + $0x20] sm:$0xff]
        %v467 = vld [vmem:[%s380 + $0x28] sm:$0xff]
        %v468 = vld [vmem:[%s380 + $0x30] sm:$0xff]
        %v469 = vld [vmem:[%s380 + $0x38] sm:$0xff]
        %471 = vset.pattern.permute.xlu0 0
        %472 = vperm.xlu0 %471, %v462
        %v473 = vpop.permute.xlu0 %472
        %476 = vset.pattern.permute.xlu0 0
        %477 = vperm.xlu0 %476, %v463
        %v478 = vpop.permute.xlu0 %477
        %481 = vset.pattern.permute.xlu0 0
        %482 = vperm.xlu0 %481, %v464
        %v483 = vpop.permute.xlu0 %482
        %486 = vset.pattern.permute.xlu0 0
        %487 = vperm.xlu0 %486, %v465
        %v488 = vpop.permute.xlu0 %487
        %491 = vset.pattern.permute.xlu0 0
        %492 = vperm.xlu0 %491, %v466
        %v493 = vpop.permute.xlu0 %492
        %496 = vset.pattern.permute.xlu0 0
        %497 = vperm.xlu0 %496, %v467
        %v498 = vpop.permute.xlu0 %497
        %501 = vset.pattern.permute.xlu0 0
        %502 = vperm.xlu0 %501, %v468
        %v503 = vpop.permute.xlu0 %502
        %506 = vset.pattern.permute.xlu0 0
        %507 = vperm.xlu0 %506, %v469
        %v508 = vpop.permute.xlu0 %507
        %v510 = vadd.f32 %v454, %v473
        %v511 = vadd.f32 %v455, %v478
        %v512 = vadd.f32 %v456, %v483
        %v513 = vadd.f32 %v457, %v488
        %v514 = vadd.f32 %v458, %v493
        %v515 = vadd.f32 %v459, %v498
        %v516 = vadd.f32 %v460, %v503
        %v517 = vadd.f32 %v461, %v508
        %v518 = vmul.f32 %v510, 0.5
        %v519 = vmul.f32 %v511, 0.5
        %v520 = vmul.f32 %v512, 0.5
        %v521 = vmul.f32 %v513, 0.5
        %v522 = vmul.f32 %v514, 0.5
        %v523 = vmul.f32 %v515, 0.5
        %v524 = vmul.f32 %v516, 0.5
        %v525 = vmul.f32 %v517, 0.5
        %v526 = vmul.f32 %v510, 0.70710677
        %v527 = vmul.f32 %v511, 0.70710677
        %v528 = vmul.f32 %v512, 0.70710677
        %v529 = vmul.f32 %v513, 0.70710677
        %v530 = vmul.f32 %v514, 0.70710677
        %v531 = vmul.f32 %v515, 0.70710677
        %v532 = vmul.f32 %v516, 0.70710677
        %v533 = vmul.f32 %v517, 0.70710677
        %v534 = verf.f32.pop %v526
        %v535 = verf.f32.pop %v527
        %v536 = verf.f32.pop %v528
        %v537 = verf.f32.pop %v529
        %v538 = verf.f32.pop %v530
        %v539 = verf.f32.pop %v531
        %v540 = verf.f32.pop %v532
        %v541 = verf.f32.pop %v533
        %v542 = vadd.f32 %v534, 1.0
        %v543 = vadd.f32 %v535, 1.0
        %v544 = vadd.f32 %v536, 1.0
        %v545 = vadd.f32 %v537, 1.0
        %v546 = vadd.f32 %v538, 1.0
        %v547 = vadd.f32 %v539, 1.0
        %v548 = vadd.f32 %v540, 1.0
        %v549 = vadd.f32 %v541, 1.0
        %v550 = vmul.f32 %v518, %v542
        %v551 = vmul.f32 %v519, %v543
        %v552 = vmul.f32 %v520, %v544
        %v553 = vmul.f32 %v521, %v545
        %v554 = vmul.f32 %v522, %v546
        %v555 = vmul.f32 %v523, %v547
        %v556 = vmul.f32 %v524, %v548
        %v557 = vmul.f32 %v525, %v549
        %v558 = vld [vmem:[%s385] sm:$0xff]
        %v559 = vld [vmem:[%s385 + $0x8] sm:$0xff]
        %v560 = vld [vmem:[%s385 + $0x10] sm:$0xff]
        %v561 = vld [vmem:[%s385 + $0x18] sm:$0xff]
        %v562 = vld [vmem:[%s385 + $0x20] sm:$0xff]
        %v563 = vld [vmem:[%s385 + $0x28] sm:$0xff]
        %v564 = vld [vmem:[%s385 + $0x30] sm:$0xff]
        %v565 = vld [vmem:[%s385 + $0x38] sm:$0xff]
        %v566 = vld [vmem:[%s390] sm:$0xff]
        %v567 = vld [vmem:[%s390 + $0x8] sm:$0xff]
        %v568 = vld [vmem:[%s390 + $0x10] sm:$0xff]
        %v569 = vld [vmem:[%s390 + $0x18] sm:$0xff]
        %v570 = vld [vmem:[%s390 + $0x20] sm:$0xff]
        %v571 = vld [vmem:[%s390 + $0x28] sm:$0xff]
        %v572 = vld [vmem:[%s390 + $0x30] sm:$0xff]
        %v573 = vld [vmem:[%s390 + $0x38] sm:$0xff]
        %575 = vset.pattern.permute.xlu0 0
        %576 = vperm.xlu0 %575, %v566
        %v577 = vpop.permute.xlu0 %576
        %580 = vset.pattern.permute.xlu0 0
        %581 = vperm.xlu0 %580, %v567
        %v582 = vpop.permute.xlu0 %581
        %585 = vset.pattern.permute.xlu0 0
        %586 = vperm.xlu0 %585, %v568
        %v587 = vpop.permute.xlu0 %586
        %590 = vset.pattern.permute.xlu0 0
        %591 = vperm.xlu0 %590, %v569
        %v592 = vpop.permute.xlu0 %591
        %595 = vset.pattern.permute.xlu0 0
        %596 = vperm.xlu0 %595, %v570
        %v597 = vpop.permute.xlu0 %596
        %600 = vset.pattern.permute.xlu0 0
        %601 = vperm.xlu0 %600, %v571
        %v602 = vpop.permute.xlu0 %601
        %605 = vset.pattern.permute.xlu0 0
        %606 = vperm.xlu0 %605, %v572
        %v607 = vpop.permute.xlu0 %606
        %610 = vset.pattern.permute.xlu0 0
        %611 = vperm.xlu0 %610, %v573
        %v612 = vpop.permute.xlu0 %611
        %vm614 = vcmask 523264
        %v616 = vsel %vm614, %v558, 0
        %v619 = vsel %vm614, %v559, 0
        %v622 = vsel %vm614, %v560, 0
        %v625 = vsel %vm614, %v561, 0
        %v628 = vsel %vm614, %v562, 0
        %v631 = vsel %vm614, %v563, 0
        %v634 = vsel %vm614, %v564, 0
        %v637 = vsel %vm614, %v565, 0
        %639 = vmatprep.subr.mxu0 0.0
        %640 = vmatpush1.msra.mxu0 %v550
        %641 = vmatprep.subr.mxu0 0.0
        %642 = vmatpush1.msra.mxu0 %v551
        %643 = vmatprep.subr.mxu0 0.0
        %644 = vmatpush1.msra.mxu0 %v552
        %645 = vmatprep.subr.mxu0 0.0
        %646 = vmatpush1.msra.mxu0 %v553
        %647 = vmatprep.subr.mxu0 0.0
        %648 = vmatpush1.msra.mxu0 %v554
        %649 = vmatprep.subr.mxu0 0.0
        %650 = vmatpush1.msra.mxu0 %v555
        %651 = vmatprep.subr.mxu0 0.0
        %652 = vmatpush1.msra.mxu0 %v556
        %653 = vmatprep.subr.mxu0 0.0
        %654 = vmatpush1.msra.mxu0 %v557
        %655 = vmatprep.subr.mxu0 0.0
        %656 = vmatpush1.msra.mxu0 0.0
        %657 = vmatprep.subr.mxu0 0.0
        %658 = vmatpush1.msra.mxu0 0.0
        %659 = vmatprep.subr.mxu0 0.0
        %660 = vmatpush1.msra.mxu0 0.0
        %661 = vmatprep.subr.mxu0 0.0
        %662 = vmatpush1.msra.mxu0 0.0
        %663 = vmatprep.subr.mxu0 0.0
        %664 = vmatpush1.msra.mxu0 0.0
        %665 = vmatprep.subr.mxu0 0.0
        %666 = vmatpush1.msra.mxu0 0.0
        %667 = vmatprep.subr.mxu0 0.0
        %668 = vmatpush1.msra.mxu0 0.0
        %669 = vmatprep.subr.mxu0 0.0
        %670 = vmatpush1.msra.mxu0 0.0
        %671 = vmatprep.subr.mxu0 0.0
        %672 = vmatpush1.msra.mxu0 0.0
        %673 = vmatprep.subr.mxu0 0.0
        %674 = vmatpush1.msra.mxu0 0.0
        %675 = vmatprep.subr.mxu0 0.0
        %676 = vmatpush1.msra.mxu0 0.0
        %677 = vmatprep.subr.mxu0 0.0
        %678 = vmatpush1.msra.mxu0 0.0
        %679 = vmatprep.subr.mxu0 0.0
        %680 = vmatpush1.msra.mxu0 0.0
        %681 = vmatprep.subr.mxu0 0.0
        %682 = vmatpush1.msra.mxu0 0.0
        %683 = vmatprep.subr.mxu0 0.0
        %684 = vmatpush1.msra.mxu0 0.0
        %685 = vmatprep.subr.mxu0 0.0
        %686 = vmatpush1.msra.mxu0 0.0
        %687 = vmatprep.subr.mxu0 0.0
        %688 = vmatpush1.msra.mxu0 0.0
        %689 = vmatprep.subr.mxu0 0.0
        %690 = vmatpush1.msra.mxu0 0.0
        %691 = vmatprep.subr.mxu0 0.0
        %692 = vmatpush1.msra.mxu0 0.0
        %693 = vmatprep.subr.mxu0 0.0
        %694 = vmatpush1.msra.mxu0 0.0
        %695 = vmatprep.subr.mxu0 0.0
        %696 = vmatpush1.msra.mxu0 0.0
        %697 = vmatprep.subr.mxu0 0.0
        %698 = vmatpush1.msra.mxu0 0.0
        %699 = vmatprep.subr.mxu0 0.0
        %700 = vmatpush1.msra.mxu0 0.0
        %701 = vmatprep.subr.mxu0 0.0
        %702 = vmatpush1.msra.mxu0 0.0
        %703 = vmatprep.mubr.f32.mxu0 0.0
        %704 = vmatmul.mubr.f32.gmra.mrb[0].mxu0 %v616
        %v705 = vpop.f32.mrb[0].mxu0
        %v706 = vadd.f32 %v577, %v705
        %v707 = vpop.f32.mrb[0].mxu0
        %708 = vmatprep.mubr.f32.mxu0 0.0
        %709 = vmatmul.mubr.f32.gmra.mrb[0].mxu0 %v619
        %v710 = vpop.f32.mrb[0].mxu0
        %v711 = vadd.f32 %v582, %v710
        %v712 = vpop.f32.mrb[0].mxu0
        %713 = vmatprep.mubr.f32.mxu0 0.0
        %714 = vmatmul.mubr.f32.gmra.mrb[0].mxu0 %v622
        %v715 = vpop.f32.mrb[0].mxu0
        %v716 = vadd.f32 %v587, %v715
        %v717 = vpop.f32.mrb[0].mxu0
        %718 = vmatprep.mubr.f32.mxu0 0.0
        %719 = vmatmul.mubr.f32.gmra.mrb[0].mxu0 %v625
        %v720 = vpop.f32.mrb[0].mxu0
        %v721 = vadd.f32 %v592, %v720
        %v722 = vpop.f32.mrb[0].mxu0
        %723 = vmatprep.mubr.f32.mxu0 0.0
        %724 = vmatmul.mubr.f32.gmra.mrb[0].mxu0 %v628
        %v725 = vpop.f32.mrb[0].mxu0
        %v726 = vadd.f32 %v597, %v725
        %v727 = vpop.f32.mrb[0].mxu0
        %728 = vmatprep.mubr.f32.mxu0 0.0
        %729 = vmatmul.mubr.f32.gmra.mrb[0].mxu0 %v631
        %v730 = vpop.f32.mrb[0].mxu0
        %v731 = vadd.f32 %v602, %v730
        %v732 = vpop.f32.mrb[0].mxu0
        %733 = vmatprep.mubr.f32.mxu0 0.0
        %734 = vmatmul.mubr.f32.gmra.mrb[0].mxu0 %v634
        %v735 = vpop.f32.mrb[0].mxu0
        %v736 = vadd.f32 %v607, %v735
        %v737 = vpop.f32.mrb[0].mxu0
        %738 = vmatprep.mubr.f32.mxu0 0.0
        %739 = vmatmul.mubr.f32.gmra.mrb[0].mxu0 %v637
        %v740 = vpop.f32.mrb[0].mxu0
        %v741 = vadd.f32 %v612, %v740
        %v742 = vpop.f32.mrb[0].mxu0
        %743 = vdwg.mxu0
        %v744 = vmul.f32 %v706, 0.5
        %v745 = vmul.f32 %v711, 0.5
        %v746 = vmul.f32 %v716, 0.5
        %v747 = vmul.f32 %v721, 0.5
        %v748 = vmul.f32 %v726, 0.5
        %v749 = vmul.f32 %v731, 0.5
        %v750 = vmul.f32 %v736, 0.5
        %v751 = vmul.f32 %v741, 0.5
        %v752 = vmul.f32 %v706, 0.70710677
        %v753 = vmul.f32 %v711, 0.70710677
        %v754 = vmul.f32 %v716, 0.70710677
        %v755 = vmul.f32 %v721, 0.70710677
        %v756 = vmul.f32 %v726, 0.70710677
        %v757 = vmul.f32 %v731, 0.70710677
        %v758 = vmul.f32 %v736, 0.70710677
        %v759 = vmul.f32 %v741, 0.70710677
        %v760 = verf.f32.pop %v752
        %v761 = verf.f32.pop %v753
        %v762 = verf.f32.pop %v754
        %v763 = verf.f32.pop %v755
        %v764 = verf.f32.pop %v756
        %v765 = verf.f32.pop %v757
        %v766 = verf.f32.pop %v758
        %v767 = verf.f32.pop %v759
        %v768 = vadd.f32 %v760, 1.0
        %v769 = vadd.f32 %v761, 1.0
        %v770 = vadd.f32 %v762, 1.0
        %v771 = vadd.f32 %v763, 1.0
        %v772 = vadd.f32 %v764, 1.0
        %v773 = vadd.f32 %v765, 1.0
        %v774 = vadd.f32 %v766, 1.0
        %v775 = vadd.f32 %v767, 1.0
        %v776 = vmul.f32 %v744, %v768
        %v777 = vmul.f32 %v745, %v769
        %v778 = vmul.f32 %v746, %v770
        %v779 = vmul.f32 %v747, %v771
        %v780 = vmul.f32 %v748, %v772
        %v781 = vmul.f32 %v749, %v773
        %v782 = vmul.f32 %v750, %v774
        %v783 = vmul.f32 %v751, %v775
        %s784 = scalar_lea.vmem %s385, 64
        %v785 = vld [vmem:[%s784] sm:$0xff]
        %v786 = vld [vmem:[%s784 + $0x8] sm:$0xff]
        %v787 = vld [vmem:[%s784 + $0x10] sm:$0xff]
        %v788 = vld [vmem:[%s784 + $0x18] sm:$0xff]
        %v789 = vld [vmem:[%s784 + $0x20] sm:$0xff]
        %v790 = vld [vmem:[%s784 + $0x28] sm:$0xff]
        %v791 = vld [vmem:[%s784 + $0x30] sm:$0xff]
        %v792 = vld [vmem:[%s784 + $0x38] sm:$0xff]
        %s793 = scalar_lea.vmem %s390, 64
        %v794 = vld [vmem:[%s793] sm:$0xff]
        %v795 = vld [vmem:[%s793 + $0x8] sm:$0xff]
        %v796 = vld [vmem:[%s793 + $0x10] sm:$0xff]
        %v797 = vld [vmem:[%s793 + $0x18] sm:$0xff]
        %v798 = vld [vmem:[%s793 + $0x20] sm:$0xff]
        %v799 = vld [vmem:[%s793 + $0x28] sm:$0xff]
        %v800 = vld [vmem:[%s793 + $0x30] sm:$0xff]
        %v801 = vld [vmem:[%s793 + $0x38] sm:$0xff]
        %803 = vset.pattern.permute.xlu0 0
        %804 = vperm.xlu0 %803, %v794
        %v805 = vpop.permute.xlu0 %804
        %808 = vset.pattern.permute.xlu0 0
        %809 = vperm.xlu0 %808, %v795
        %v810 = vpop.permute.xlu0 %809
        %813 = vset.pattern.permute.xlu0 0
        %814 = vperm.xlu0 %813, %v796
        %v815 = vpop.permute.xlu0 %814
        %818 = vset.pattern.permute.xlu0 0
        %819 = vperm.xlu0 %818, %v797
        %v820 = vpop.permute.xlu0 %819
        %823 = vset.pattern.permute.xlu0 0
        %824 = vperm.xlu0 %823, %v798
        %v825 = vpop.permute.xlu0 %824
        %828 = vset.pattern.permute.xlu0 0
        %829 = vperm.xlu0 %828, %v799
        %v830 = vpop.permute.xlu0 %829
        %833 = vset.pattern.permute.xlu0 0
        %834 = vperm.xlu0 %833, %v800
        %v835 = vpop.permute.xlu0 %834
        %838 = vset.pattern.permute.xlu0 0
        %839 = vperm.xlu0 %838, %v801
        %v840 = vpop.permute.xlu0 %839
        %v843 = vsel %vm614, %v785, 0
        %v846 = vsel %vm614, %v786, 0
        %v849 = vsel %vm614, %v787, 0
        %v852 = vsel %vm614, %v788, 0
        %v855 = vsel %vm614, %v789, 0
        %v858 = vsel %vm614, %v790, 0
        %v861 = vsel %vm614, %v791, 0
        %v864 = vsel %vm614, %v792, 0
        %866 = vmatprep.subr.mxu0 0.0
        %867 = vmatpush1.msra.mxu0 %v776
        %868 = vmatprep.subr.mxu0 0.0
        %869 = vmatpush1.msra.mxu0 %v777
        %870 = vmatprep.subr.mxu0 0.0
        %871 = vmatpush1.msra.mxu0 %v778
        %872 = vmatprep.subr.mxu0 0.0
        %873 = vmatpush1.msra.mxu0 %v779
        %874 = vmatprep.subr.mxu0 0.0
        %875 = vmatpush1.msra.mxu0 %v780
        %876 = vmatprep.subr.mxu0 0.0
        %877 = vmatpush1.msra.mxu0 %v781
        %878 = vmatprep.subr.mxu0 0.0
        %879 = vmatpush1.msra.mxu0 %v782
        %880 = vmatprep.subr.mxu0 0.0
        %881 = vmatpush1.msra.mxu0 %v783
        %882 = vmatprep.subr.mxu0 0.0
        %883 = vmatpush1.msra.mxu0 0.0
        %884 = vmatprep.subr.mxu0 0.0
        %885 = vmatpush1.msra.mxu0 0.0
        %886 = vmatprep.subr.mxu0 0.0
        %887 = vmatpush1.msra.mxu0 0.0
        %888 = vmatprep.subr.mxu0 0.0
        %889 = vmatpush1.msra.mxu0 0.0
        %890 = vmatprep.subr.mxu0 0.0
        %891 = vmatpush1.msra.mxu0 0.0
        %892 = vmatprep.subr.mxu0 0.0
        %893 = vmatpush1.msra.mxu0 0.0
        %894 = vmatprep.subr.mxu0 0.0
        %895 = vmatpush1.msra.mxu0 0.0
        %896 = vmatprep.subr.mxu0 0.0
        %897 = vmatpush1.msra.mxu0 0.0
        %898 = vmatprep.subr.mxu0 0.0
        %899 = vmatpush1.msra.mxu0 0.0
        %900 = vmatprep.subr.mxu0 0.0
        %901 = vmatpush1.msra.mxu0 0.0
        %902 = vmatprep.subr.mxu0 0.0
        %903 = vmatpush1.msra.mxu0 0.0
        %904 = vmatprep.subr.mxu0 0.0
        %905 = vmatpush1.msra.mxu0 0.0
        %906 = vmatprep.subr.mxu0 0.0
        %907 = vmatpush1.msra.mxu0 0.0
        %908 = vmatprep.subr.mxu0 0.0
        %909 = vmatpush1.msra.mxu0 0.0
        %910 = vmatprep.subr.mxu0 0.0
        %911 = vmatpush1.msra.mxu0 0.0
        %912 = vmatprep.subr.mxu0 0.0
        %913 = vmatpush1.msra.mxu0 0.0
        %914 = vmatprep.subr.mxu0 0.0
        %915 = vmatpush1.msra.mxu0 0.0
        %916 = vmatprep.subr.mxu0 0.0
        %917 = vmatpush1.msra.mxu0 0.0
        %918 = vmatprep.subr.mxu0 0.0
        %919 = vmatpush1.msra.mxu0 0.0
        %920 = vmatprep.subr.mxu0 0.0
        %921 = vmatpush1.msra.mxu0 0.0
        %922 = vmatprep.subr.mxu0 0.0
        %923 = vmatpush1.msra.mxu0 0.0
        %924 = vmatprep.subr.mxu0 0.0
        %925 = vmatpush1.msra.mxu0 0.0
        %926 = vmatprep.subr.mxu0 0.0
        %927 = vmatpush1.msra.mxu0 0.0
        %928 = vmatprep.subr.mxu0 0.0
        %929 = vmatpush1.msra.mxu0 0.0
        %930 = vmatprep.mubr.f32.mxu0 0.0
        %931 = vmatmul.mubr.f32.gmra.mrb[0].mxu0 %v843
        %v932 = vpop.f32.mrb[0].mxu0
        %v933 = vadd.f32 %v805, %v932
        %v934 = vpop.f32.mrb[0].mxu0
        %935 = vmatprep.mubr.f32.mxu0 0.0
        %936 = vmatmul.mubr.f32.gmra.mrb[0].mxu0 %v846
        %v937 = vpop.f32.mrb[0].mxu0
        %v938 = vadd.f32 %v810, %v937
        %v939 = vpop.f32.mrb[0].mxu0
        %940 = vmatprep.mubr.f32.mxu0 0.0
        %941 = vmatmul.mubr.f32.gmra.mrb[0].mxu0 %v849
        %v942 = vpop.f32.mrb[0].mxu0
        %v943 = vadd.f32 %v815, %v942
        %v944 = vpop.f32.mrb[0].mxu0
        %945 = vmatprep.mubr.f32.mxu0 0.0
        %946 = vmatmul.mubr.f32.gmra.mrb[0].mxu0 %v852
        %v947 = vpop.f32.mrb[0].mxu0
        %v948 = vadd.f32 %v820, %v947
        %v949 = vpop.f32.mrb[0].mxu0
        %950 = vmatprep.mubr.f32.mxu0 0.0
        %951 = vmatmul.mubr.f32.gmra.mrb[0].mxu0 %v855
        %v952 = vpop.f32.mrb[0].mxu0
        %v953 = vadd.f32 %v825, %v952
        %v954 = vpop.f32.mrb[0].mxu0
        %955 = vmatprep.mubr.f32.mxu0 0.0
        %956 = vmatmul.mubr.f32.gmra.mrb[0].mxu0 %v858
        %v957 = vpop.f32.mrb[0].mxu0
        %v958 = vadd.f32 %v830, %v957
        %v959 = vpop.f32.mrb[0].mxu0
        %960 = vmatprep.mubr.f32.mxu0 0.0
        %961 = vmatmul.mubr.f32.gmra.mrb[0].mxu0 %v861
        %v962 = vpop.f32.mrb[0].mxu0
        %v963 = vadd.f32 %v835, %v962
        %v964 = vpop.f32.mrb[0].mxu0
        %965 = vmatprep.mubr.f32.mxu0 0.0
        %966 = vmatmul.mubr.f32.gmra.mrb[0].mxu0 %v864
        %v967 = vpop.f32.mrb[0].mxu0
        %v968 = vadd.f32 %v840, %v967
        %v969 = vpop.f32.mrb[0].mxu0
        %970 = vdwg.mxu0
        %v971 = vmul.f32 %v933, 0.5
        %v972 = vmul.f32 %v938, 0.5
        %v973 = vmul.f32 %v943, 0.5
        %v974 = vmul.f32 %v948, 0.5
        %v975 = vmul.f32 %v953, 0.5
        %v976 = vmul.f32 %v958, 0.5
        %v977 = vmul.f32 %v963, 0.5
        %v978 = vmul.f32 %v968, 0.5
        %v979 = vmul.f32 %v933, 0.70710677
        %v980 = vmul.f32 %v938, 0.70710677
        %v981 = vmul.f32 %v943, 0.70710677
        %v982 = vmul.f32 %v948, 0.70710677
        %v983 = vmul.f32 %v953, 0.70710677
        %v984 = vmul.f32 %v958, 0.70710677
        %v985 = vmul.f32 %v963, 0.70710677
        %v986 = vmul.f32 %v968, 0.70710677
        %v987 = verf.f32.pop %v979
        %v988 = verf.f32.pop %v980
        %v989 = verf.f32.pop %v981
        %v990 = verf.f32.pop %v982
        %v991 = verf.f32.pop %v983
        %v992 = verf.f32.pop %v984
        %v993 = verf.f32.pop %v985
        %v994 = verf.f32.pop %v986
        %v995 = vadd.f32 %v987, 1.0
        %v996 = vadd.f32 %v988, 1.0
        %v997 = vadd.f32 %v989, 1.0
        %v998 = vadd.f32 %v990, 1.0
        %v999 = vadd.f32 %v991, 1.0
        %v1000 = vadd.f32 %v992, 1.0
        %v1001 = vadd.f32 %v993, 1.0
        %v1002 = vadd.f32 %v994, 1.0
        %v1003 = vmul.f32 %v971, %v995
        %v1004 = vmul.f32 %v972, %v996
        %v1005 = vmul.f32 %v973, %v997
        %v1006 = vmul.f32 %v974, %v998
        %v1007 = vmul.f32 %v975, %v999
        %v1008 = vmul.f32 %v976, %v1000
        %v1009 = vmul.f32 %v977, %v1001
        %v1010 = vmul.f32 %v978, %v1002
        %s1011 = scalar_lea.vmem %s385, 128
        %v1012 = vld [vmem:[%s1011] sm:$0xff]
        %v1013 = vld [vmem:[%s1011 + $0x8] sm:$0xff]
        %v1014 = vld [vmem:[%s1011 + $0x10] sm:$0xff]
        %v1015 = vld [vmem:[%s1011 + $0x18] sm:$0xff]
        %v1016 = vld [vmem:[%s1011 + $0x20] sm:$0xff]
        %v1017 = vld [vmem:[%s1011 + $0x28] sm:$0xff]
        %v1018 = vld [vmem:[%s1011 + $0x30] sm:$0xff]
        %v1019 = vld [vmem:[%s1011 + $0x38] sm:$0xff]
        %s1020 = scalar_lea.vmem %s390, 128
        %v1021 = vld [vmem:[%s1020] sm:$0xff]
        %v1022 = vld [vmem:[%s1020 + $0x8] sm:$0xff]
        %v1023 = vld [vmem:[%s1020 + $0x10] sm:$0xff]
        %v1024 = vld [vmem:[%s1020 + $0x18] sm:$0xff]
        %v1025 = vld [vmem:[%s1020 + $0x20] sm:$0xff]
        %v1026 = vld [vmem:[%s1020 + $0x28] sm:$0xff]
        %v1027 = vld [vmem:[%s1020 + $0x30] sm:$0xff]
        %v1028 = vld [vmem:[%s1020 + $0x38] sm:$0xff]
        %1030 = vset.pattern.permute.xlu0 0
        %1031 = vperm.xlu0 %1030, %v1021
        %v1032 = vpop.permute.xlu0 %1031
        %1035 = vset.pattern.permute.xlu0 0
        %1036 = vperm.xlu0 %1035, %v1022
        %v1037 = vpop.permute.xlu0 %1036
        %1040 = vset.pattern.permute.xlu0 0
        %1041 = vperm.xlu0 %1040, %v1023
        %v1042 = vpop.permute.xlu0 %1041
        %1045 = vset.pattern.permute.xlu0 0
        %1046 = vperm.xlu0 %1045, %v1024
        %v1047 = vpop.permute.xlu0 %1046
        %1050 = vset.pattern.permute.xlu0 0
        %1051 = vperm.xlu0 %1050, %v1025
        %v1052 = vpop.permute.xlu0 %1051
        %1055 = vset.pattern.permute.xlu0 0
        %1056 = vperm.xlu0 %1055, %v1026
        %v1057 = vpop.permute.xlu0 %1056
        %1060 = vset.pattern.permute.xlu0 0
        %1061 = vperm.xlu0 %1060, %v1027
        %v1062 = vpop.permute.xlu0 %1061
        %1065 = vset.pattern.permute.xlu0 0
        %1066 = vperm.xlu0 %1065, %v1028
        %v1067 = vpop.permute.xlu0 %1066
        %v1070 = vsel %vm614, %v1012, 0
        %v1073 = vsel %vm614, %v1013, 0
        %v1076 = vsel %vm614, %v1014, 0
        %v1079 = vsel %vm614, %v1015, 0
        %v1082 = vsel %vm614, %v1016, 0
        %v1085 = vsel %vm614, %v1017, 0
        %v1088 = vsel %vm614, %v1018, 0
        %v1091 = vsel %vm614, %v1019, 0
        %1093 = vmatprep.subr.mxu0 0.0
        %1094 = vmatpush1.msra.mxu0 %v1003
        %1095 = vmatprep.subr.mxu0 0.0
        %1096 = vmatpush1.msra.mxu0 %v1004
        %1097 = vmatprep.subr.mxu0 0.0
        %1098 = vmatpush1.msra.mxu0 %v1005
        %1099 = vmatprep.subr.mxu0 0.0
        %1100 = vmatpush1.msra.mxu0 %v1006
        %1101 = vmatprep.subr.mxu0 0.0
        %1102 = vmatpush1.msra.mxu0 %v1007
        %1103 = vmatprep.subr.mxu0 0.0
        %1104 = vmatpush1.msra.mxu0 %v1008
        %1105 = vmatprep.subr.mxu0 0.0
        %1106 = vmatpush1.msra.mxu0 %v1009
        %1107 = vmatprep.subr.mxu0 0.0
        %1108 = vmatpush1.msra.mxu0 %v1010
        %1109 = vmatprep.subr.mxu0 0.0
        %1110 = vmatpush1.msra.mxu0 0.0
        %1111 = vmatprep.subr.mxu0 0.0
        %1112 = vmatpush1.msra.mxu0 0.0
        %1113 = vmatprep.subr.mxu0 0.0
        %1114 = vmatpush1.msra.mxu0 0.0
        %1115 = vmatprep.subr.mxu0 0.0
        %1116 = vmatpush1.msra.mxu0 0.0
        %1117 = vmatprep.subr.mxu0 0.0
        %1118 = vmatpush1.msra.mxu0 0.0
        %1119 = vmatprep.subr.mxu0 0.0
        %1120 = vmatpush1.msra.mxu0 0.0
        %1121 = vmatprep.subr.mxu0 0.0
        %1122 = vmatpush1.msra.mxu0 0.0
        %1123 = vmatprep.subr.mxu0 0.0
        %1124 = vmatpush1.msra.mxu0 0.0
        %1125 = vmatprep.subr.mxu0 0.0
        %1126 = vmatpush1.msra.mxu0 0.0
        %1127 = vmatprep.subr.mxu0 0.0
        %1128 = vmatpush1.msra.mxu0 0.0
        %1129 = vmatprep.subr.mxu0 0.0
        %1130 = vmatpush1.msra.mxu0 0.0
        %1131 = vmatprep.subr.mxu0 0.0
        %1132 = vmatpush1.msra.mxu0 0.0
        %1133 = vmatprep.subr.mxu0 0.0
        %1134 = vmatpush1.msra.mxu0 0.0
        %1135 = vmatprep.subr.mxu0 0.0
        %1136 = vmatpush1.msra.mxu0 0.0
        %1137 = vmatprep.subr.mxu0 0.0
        %1138 = vmatpush1.msra.mxu0 0.0
        %1139 = vmatprep.subr.mxu0 0.0
        %1140 = vmatpush1.msra.mxu0 0.0
        %1141 = vmatprep.subr.mxu0 0.0
        %1142 = vmatpush1.msra.mxu0 0.0
        %1143 = vmatprep.subr.mxu0 0.0
        %1144 = vmatpush1.msra.mxu0 0.0
        %1145 = vmatprep.subr.mxu0 0.0
        %1146 = vmatpush1.msra.mxu0 0.0
        %1147 = vmatprep.subr.mxu0 0.0
        %1148 = vmatpush1.msra.mxu0 0.0
        %1149 = vmatprep.subr.mxu0 0.0
        %1150 = vmatpush1.msra.mxu0 0.0
        %1151 = vmatprep.subr.mxu0 0.0
        %1152 = vmatpush1.msra.mxu0 0.0
        %1153 = vmatprep.subr.mxu0 0.0
        %1154 = vmatpush1.msra.mxu0 0.0
        %1155 = vmatprep.subr.mxu0 0.0
        %1156 = vmatpush1.msra.mxu0 0.0
        %1157 = vmatprep.mubr.f32.mxu0 0.0
        %1158 = vmatmul.mubr.f32.gmra.mrb[0].mxu0 %v1070
        %v1159 = vpop.f32.mrb[0].mxu0
        %v1160 = vadd.f32 %v1032, %v1159
        %v1161 = vpop.f32.mrb[0].mxu0
        %1162 = vmatprep.mubr.f32.mxu0 0.0
        %1163 = vmatmul.mubr.f32.gmra.mrb[0].mxu0 %v1073
        %v1164 = vpop.f32.mrb[0].mxu0
        %v1165 = vadd.f32 %v1037, %v1164
        %v1166 = vpop.f32.mrb[0].mxu0
        %1167 = vmatprep.mubr.f32.mxu0 0.0
        %1168 = vmatmul.mubr.f32.gmra.mrb[0].mxu0 %v1076
        %v1169 = vpop.f32.mrb[0].mxu0
        %v1170 = vadd.f32 %v1042, %v1169
        %v1171 = vpop.f32.mrb[0].mxu0
        %1172 = vmatprep.mubr.f32.mxu0 0.0
        %1173 = vmatmul.mubr.f32.gmra.mrb[0].mxu0 %v1079
        %v1174 = vpop.f32.mrb[0].mxu0
        %v1175 = vadd.f32 %v1047, %v1174
        %v1176 = vpop.f32.mrb[0].mxu0
        %1177 = vmatprep.mubr.f32.mxu0 0.0
        %1178 = vmatmul.mubr.f32.gmra.mrb[0].mxu0 %v1082
        %v1179 = vpop.f32.mrb[0].mxu0
        %v1180 = vadd.f32 %v1052, %v1179
        %v1181 = vpop.f32.mrb[0].mxu0
        %1182 = vmatprep.mubr.f32.mxu0 0.0
        %1183 = vmatmul.mubr.f32.gmra.mrb[0].mxu0 %v1085
        %v1184 = vpop.f32.mrb[0].mxu0
        %v1185 = vadd.f32 %v1057, %v1184
        %v1186 = vpop.f32.mrb[0].mxu0
        %1187 = vmatprep.mubr.f32.mxu0 0.0
        %1188 = vmatmul.mubr.f32.gmra.mrb[0].mxu0 %v1088
        %v1189 = vpop.f32.mrb[0].mxu0
        %v1190 = vadd.f32 %v1062, %v1189
        %v1191 = vpop.f32.mrb[0].mxu0
        %1192 = vmatprep.mubr.f32.mxu0 0.0
        %1193 = vmatmul.mubr.f32.gmra.mrb[0].mxu0 %v1091
        %v1194 = vpop.f32.mrb[0].mxu0
        %v1195 = vadd.f32 %v1067, %v1194
        %v1196 = vpop.f32.mrb[0].mxu0
        %1197 = vdwg.mxu0
        %v1198 = vmul.f32 %v1160, 0.5
        %v1199 = vmul.f32 %v1165, 0.5
        %v1200 = vmul.f32 %v1170, 0.5
        %v1201 = vmul.f32 %v1175, 0.5
        %v1202 = vmul.f32 %v1180, 0.5
        %v1203 = vmul.f32 %v1185, 0.5
        %v1204 = vmul.f32 %v1190, 0.5
        %v1205 = vmul.f32 %v1195, 0.5
        %v1206 = vmul.f32 %v1160, 0.70710677
        %v1207 = vmul.f32 %v1165, 0.70710677
        %v1208 = vmul.f32 %v1170, 0.70710677
        %v1209 = vmul.f32 %v1175, 0.70710677
        %v1210 = vmul.f32 %v1180, 0.70710677
        %v1211 = vmul.f32 %v1185, 0.70710677
        %v1212 = vmul.f32 %v1190, 0.70710677
        %v1213 = vmul.f32 %v1195, 0.70710677
        %v1214 = verf.f32.pop %v1206
        %v1215 = verf.f32.pop %v1207
        %v1216 = verf.f32.pop %v1208
        %v1217 = verf.f32.pop %v1209
        %v1218 = verf.f32.pop %v1210
        %v1219 = verf.f32.pop %v1211
        %v1220 = verf.f32.pop %v1212
        %v1221 = verf.f32.pop %v1213
        %v1222 = vadd.f32 %v1214, 1.0
        %v1223 = vadd.f32 %v1215, 1.0
        %v1224 = vadd.f32 %v1216, 1.0
        %v1225 = vadd.f32 %v1217, 1.0
        %v1226 = vadd.f32 %v1218, 1.0
        %v1227 = vadd.f32 %v1219, 1.0
        %v1228 = vadd.f32 %v1220, 1.0
        %v1229 = vadd.f32 %v1221, 1.0
        %v1230 = vmul.f32 %v1198, %v1222
        %v1231 = vmul.f32 %v1199, %v1223
        %v1232 = vmul.f32 %v1200, %v1224
        %v1233 = vmul.f32 %v1201, %v1225
        %v1234 = vmul.f32 %v1202, %v1226
        %v1235 = vmul.f32 %v1203, %v1227
        %v1236 = vmul.f32 %v1204, %v1228
        %v1237 = vmul.f32 %v1205, %v1229
        %s1238 = scalar_lea.vmem %s385, 192
        %v1239 = vld [vmem:[%s1238] sm:$0xff]
        %v1240 = vld [vmem:[%s1238 + $0x8] sm:$0xff]
        %v1241 = vld [vmem:[%s1238 + $0x10] sm:$0xff]
        %v1242 = vld [vmem:[%s1238 + $0x18] sm:$0xff]
        %v1243 = vld [vmem:[%s1238 + $0x20] sm:$0xff]
        %v1244 = vld [vmem:[%s1238 + $0x28] sm:$0xff]
        %v1245 = vld [vmem:[%s1238 + $0x30] sm:$0xff]
        %v1246 = vld [vmem:[%s1238 + $0x38] sm:$0xff]
        %s1247 = scalar_lea.vmem %s390, 192
        %v1248 = vld [vmem:[%s1247] sm:$0xff]
        %v1249 = vld [vmem:[%s1247 + $0x8] sm:$0xff]
        %v1250 = vld [vmem:[%s1247 + $0x10] sm:$0xff]
        %v1251 = vld [vmem:[%s1247 + $0x18] sm:$0xff]
        %v1252 = vld [vmem:[%s1247 + $0x20] sm:$0xff]
        %v1253 = vld [vmem:[%s1247 + $0x28] sm:$0xff]
        %v1254 = vld [vmem:[%s1247 + $0x30] sm:$0xff]
        %v1255 = vld [vmem:[%s1247 + $0x38] sm:$0xff]
        %1257 = vset.pattern.permute.xlu0 0
        %1258 = vperm.xlu0 %1257, %v1248
        %v1259 = vpop.permute.xlu0 %1258
        %1262 = vset.pattern.permute.xlu0 0
        %1263 = vperm.xlu0 %1262, %v1249
        %v1264 = vpop.permute.xlu0 %1263
        %1267 = vset.pattern.permute.xlu0 0
        %1268 = vperm.xlu0 %1267, %v1250
        %v1269 = vpop.permute.xlu0 %1268
        %1272 = vset.pattern.permute.xlu0 0
        %1273 = vperm.xlu0 %1272, %v1251
        %v1274 = vpop.permute.xlu0 %1273
        %1277 = vset.pattern.permute.xlu0 0
        %1278 = vperm.xlu0 %1277, %v1252
        %v1279 = vpop.permute.xlu0 %1278
        %1282 = vset.pattern.permute.xlu0 0
        %1283 = vperm.xlu0 %1282, %v1253
        %v1284 = vpop.permute.xlu0 %1283
        %1287 = vset.pattern.permute.xlu0 0
        %1288 = vperm.xlu0 %1287, %v1254
        %v1289 = vpop.permute.xlu0 %1288
        %1292 = vset.pattern.permute.xlu0 0
        %1293 = vperm.xlu0 %1292, %v1255
        %v1294 = vpop.permute.xlu0 %1293
        %v1297 = vsel %vm614, %v1239, 0
        %v1300 = vsel %vm614, %v1240, 0
        %v1303 = vsel %vm614, %v1241, 0
        %v1306 = vsel %vm614, %v1242, 0
        %v1309 = vsel %vm614, %v1243, 0
        %v1312 = vsel %vm614, %v1244, 0
        %v1315 = vsel %vm614, %v1245, 0
        %v1318 = vsel %vm614, %v1246, 0
        %1320 = vmatprep.subr.mxu0 0.0
        %1321 = vmatpush1.msra.mxu0 %v1230
        %1322 = vmatprep.subr.mxu0 0.0
        %1323 = vmatpush1.msra.mxu0 %v1231
        %1324 = vmatprep.subr.mxu0 0.0
        %1325 = vmatpush1.msra.mxu0 %v1232
        %1326 = vmatprep.subr.mxu0 0.0
        %1327 = vmatpush1.msra.mxu0 %v1233
        %1328 = vmatprep.subr.mxu0 0.0
        %1329 = vmatpush1.msra.mxu0 %v1234
        %1330 = vmatprep.subr.mxu0 0.0
        %1331 = vmatpush1.msra.mxu0 %v1235
        %1332 = vmatprep.subr.mxu0 0.0
        %1333 = vmatpush1.msra.mxu0 %v1236
        %1334 = vmatprep.subr.mxu0 0.0
        %1335 = vmatpush1.msra.mxu0 %v1237
        %1336 = vmatprep.subr.mxu0 0.0
        %1337 = vmatpush1.msra.mxu0 0.0
        %1338 = vmatprep.subr.mxu0 0.0
        %1339 = vmatpush1.msra.mxu0 0.0
        %1340 = vmatprep.subr.mxu0 0.0
        %1341 = vmatpush1.msra.mxu0 0.0
        %1342 = vmatprep.subr.mxu0 0.0
        %1343 = vmatpush1.msra.mxu0 0.0
        %1344 = vmatprep.subr.mxu0 0.0
        %1345 = vmatpush1.msra.mxu0 0.0
        %1346 = vmatprep.subr.mxu0 0.0
        %1347 = vmatpush1.msra.mxu0 0.0
        %1348 = vmatprep.subr.mxu0 0.0
        %1349 = vmatpush1.msra.mxu0 0.0
        %1350 = vmatprep.subr.mxu0 0.0
        %1351 = vmatpush1.msra.mxu0 0.0
        %1352 = vmatprep.subr.mxu0 0.0
        %1353 = vmatpush1.msra.mxu0 0.0
        %1354 = vmatprep.subr.mxu0 0.0
        %1355 = vmatpush1.msra.mxu0 0.0
        %1356 = vmatprep.subr.mxu0 0.0
        %1357 = vmatpush1.msra.mxu0 0.0
        %1358 = vmatprep.subr.mxu0 0.0
        %1359 = vmatpush1.msra.mxu0 0.0
        %1360 = vmatprep.subr.mxu0 0.0
        %1361 = vmatpush1.msra.mxu0 0.0
        %1362 = vmatprep.subr.mxu0 0.0
        %1363 = vmatpush1.msra.mxu0 0.0
        %1364 = vmatprep.subr.mxu0 0.0
        %1365 = vmatpush1.msra.mxu0 0.0
        %1366 = vmatprep.subr.mxu0 0.0
        %1367 = vmatpush1.msra.mxu0 0.0
        %1368 = vmatprep.subr.mxu0 0.0
        %1369 = vmatpush1.msra.mxu0 0.0
        %1370 = vmatprep.subr.mxu0 0.0
        %1371 = vmatpush1.msra.mxu0 0.0
        %1372 = vmatprep.subr.mxu0 0.0
        %1373 = vmatpush1.msra.mxu0 0.0
        %1374 = vmatprep.subr.mxu0 0.0
        %1375 = vmatpush1.msra.mxu0 0.0
        %1376 = vmatprep.subr.mxu0 0.0
        %1377 = vmatpush1.msra.mxu0 0.0
        %1378 = vmatprep.subr.mxu0 0.0
        %1379 = vmatpush1.msra.mxu0 0.0
        %1380 = vmatprep.subr.mxu0 0.0
        %1381 = vmatpush1.msra.mxu0 0.0
        %1382 = vmatprep.subr.mxu0 0.0
        %1383 = vmatpush1.msra.mxu0 0.0
        %1384 = vmatprep.mubr.f32.mxu0 0.0
        %1385 = vmatmul.mubr.f32.gmra.mrb[0].mxu0 %v1297
        %v1386 = vpop.f32.mrb[0].mxu0
        %v1387 = vadd.f32 %v1259, %v1386
        %v1388 = vpop.f32.mrb[0].mxu0
        %1389 = vmatprep.mubr.f32.mxu0 0.0
        %1390 = vmatmul.mubr.f32.gmra.mrb[0].mxu0 %v1300
        %v1391 = vpop.f32.mrb[0].mxu0
        %v1392 = vadd.f32 %v1264, %v1391
        %v1393 = vpop.f32.mrb[0].mxu0
        %1394 = vmatprep.mubr.f32.mxu0 0.0
        %1395 = vmatmul.mubr.f32.gmra.mrb[0].mxu0 %v1303
        %v1396 = vpop.f32.mrb[0].mxu0
        %v1397 = vadd.f32 %v1269, %v1396
        %v1398 = vpop.f32.mrb[0].mxu0
        %1399 = vmatprep.mubr.f32.mxu0 0.0
        %1400 = vmatmul.mubr.f32.gmra.mrb[0].mxu0 %v1306
        %v1401 = vpop.f32.mrb[0].mxu0
        %v1402 = vadd.f32 %v1274, %v1401
        %v1403 = vpop.f32.mrb[0].mxu0
        %1404 = vmatprep.mubr.f32.mxu0 0.0
        %1405 = vmatmul.mubr.f32.gmra.mrb[0].mxu0 %v1309
        %v1406 = vpop.f32.mrb[0].mxu0
        %v1407 = vadd.f32 %v1279, %v1406
        %v1408 = vpop.f32.mrb[0].mxu0
        %1409 = vmatprep.mubr.f32.mxu0 0.0
        %1410 = vmatmul.mubr.f32.gmra.mrb[0].mxu0 %v1312
        %v1411 = vpop.f32.mrb[0].mxu0
        %v1412 = vadd.f32 %v1284, %v1411
        %v1413 = vpop.f32.mrb[0].mxu0
        %1414 = vmatprep.mubr.f32.mxu0 0.0
        %1415 = vmatmul.mubr.f32.gmra.mrb[0].mxu0 %v1315
        %v1416 = vpop.f32.mrb[0].mxu0
        %v1417 = vadd.f32 %v1289, %v1416
        %v1418 = vpop.f32.mrb[0].mxu0
        %1419 = vmatprep.mubr.f32.mxu0 0.0
        %1420 = vmatmul.mubr.f32.gmra.mrb[0].mxu0 %v1318
        %v1421 = vpop.f32.mrb[0].mxu0
        %v1422 = vadd.f32 %v1294, %v1421
        %v1423 = vpop.f32.mrb[0].mxu0
        %1424 = vdwg.mxu0
        %v1425 = vmul.f32 %v1387, 0.5
        %v1426 = vmul.f32 %v1392, 0.5
        %v1427 = vmul.f32 %v1397, 0.5
        %v1428 = vmul.f32 %v1402, 0.5
        %v1429 = vmul.f32 %v1407, 0.5
        %v1430 = vmul.f32 %v1412, 0.5
        %v1431 = vmul.f32 %v1417, 0.5
        %v1432 = vmul.f32 %v1422, 0.5
        %v1433 = vmul.f32 %v1387, 0.70710677
        %v1434 = vmul.f32 %v1392, 0.70710677
        %v1435 = vmul.f32 %v1397, 0.70710677
        %v1436 = vmul.f32 %v1402, 0.70710677
        %v1437 = vmul.f32 %v1407, 0.70710677
        %v1438 = vmul.f32 %v1412, 0.70710677
        %v1439 = vmul.f32 %v1417, 0.70710677
        %v1440 = vmul.f32 %v1422, 0.70710677
        %v1441 = verf.f32.pop %v1433
        %v1442 = verf.f32.pop %v1434
        %v1443 = verf.f32.pop %v1435
        %v1444 = verf.f32.pop %v1436
        %v1445 = verf.f32.pop %v1437
        %v1446 = verf.f32.pop %v1438
        %v1447 = verf.f32.pop %v1439
        %v1448 = verf.f32.pop %v1440
        %v1449 = vadd.f32 %v1441, 1.0
        %v1450 = vadd.f32 %v1442, 1.0
        %v1451 = vadd.f32 %v1443, 1.0
        %v1452 = vadd.f32 %v1444, 1.0
        %v1453 = vadd.f32 %v1445, 1.0
        %v1454 = vadd.f32 %v1446, 1.0
        %v1455 = vadd.f32 %v1447, 1.0
        %v1456 = vadd.f32 %v1448, 1.0
        %v1457 = vmul.f32 %v1425, %v1449
        %v1458 = vmul.f32 %v1426, %v1450
        %v1459 = vmul.f32 %v1427, %v1451
        %v1460 = vmul.f32 %v1428, %v1452
        %v1461 = vmul.f32 %v1429, %v1453
        %v1462 = vmul.f32 %v1430, %v1454
        %v1463 = vmul.f32 %v1431, %v1455
        %v1464 = vmul.f32 %v1432, %v1456
        %s1465 = scalar_lea.vmem %s385, 256
        %v1466 = vld [vmem:[%s1465] sm:$0xff]
        %v1467 = vld [vmem:[%s1465 + $0x8] sm:$0xff]
        %v1468 = vld [vmem:[%s1465 + $0x10] sm:$0xff]
        %v1469 = vld [vmem:[%s1465 + $0x18] sm:$0xff]
        %v1470 = vld [vmem:[%s1465 + $0x20] sm:$0xff]
        %v1471 = vld [vmem:[%s1465 + $0x28] sm:$0xff]
        %v1472 = vld [vmem:[%s1465 + $0x30] sm:$0xff]
        %v1473 = vld [vmem:[%s1465 + $0x38] sm:$0xff]
        %s1474 = scalar_lea.vmem %s390, 256
        %v1475 = vld [vmem:[%s1474] sm:$0xff]
        %v1476 = vld [vmem:[%s1474 + $0x8] sm:$0xff]
        %v1477 = vld [vmem:[%s1474 + $0x10] sm:$0xff]
        %v1478 = vld [vmem:[%s1474 + $0x18] sm:$0xff]
        %v1479 = vld [vmem:[%s1474 + $0x20] sm:$0xff]
        %v1480 = vld [vmem:[%s1474 + $0x28] sm:$0xff]
        %v1481 = vld [vmem:[%s1474 + $0x30] sm:$0xff]
        %v1482 = vld [vmem:[%s1474 + $0x38] sm:$0xff]
        %1484 = vset.pattern.permute.xlu0 0
        %1485 = vperm.xlu0 %1484, %v1475
        %v1486 = vpop.permute.xlu0 %1485
        %1489 = vset.pattern.permute.xlu0 0
        %1490 = vperm.xlu0 %1489, %v1476
        %v1491 = vpop.permute.xlu0 %1490
        %1494 = vset.pattern.permute.xlu0 0
        %1495 = vperm.xlu0 %1494, %v1477
        %v1496 = vpop.permute.xlu0 %1495
        %1499 = vset.pattern.permute.xlu0 0
        %1500 = vperm.xlu0 %1499, %v1478
        %v1501 = vpop.permute.xlu0 %1500
        %1504 = vset.pattern.permute.xlu0 0
        %1505 = vperm.xlu0 %1504, %v1479
        %v1506 = vpop.permute.xlu0 %1505
        %1509 = vset.pattern.permute.xlu0 0
        %1510 = vperm.xlu0 %1509, %v1480
        %v1511 = vpop.permute.xlu0 %1510
        %1514 = vset.pattern.permute.xlu0 0
        %1515 = vperm.xlu0 %1514, %v1481
        %v1516 = vpop.permute.xlu0 %1515
        %1519 = vset.pattern.permute.xlu0 0
        %1520 = vperm.xlu0 %1519, %v1482
        %v1521 = vpop.permute.xlu0 %1520
        %v1524 = vsel %vm614, %v1466, 0
        %v1527 = vsel %vm614, %v1467, 0
        %v1530 = vsel %vm614, %v1468, 0
        %v1533 = vsel %vm614, %v1469, 0
        %v1536 = vsel %vm614, %v1470, 0
        %v1539 = vsel %vm614, %v1471, 0
        %v1542 = vsel %vm614, %v1472, 0
        %v1545 = vsel %vm614, %v1473, 0
        %1547 = vmatprep.subr.mxu0 0.0
        %1548 = vmatpush1.msra.mxu0 %v1457
        %1549 = vmatprep.subr.mxu0 0.0
        %1550 = vmatpush1.msra.mxu0 %v1458
        %1551 = vmatprep.subr.mxu0 0.0
        %1552 = vmatpush1.msra.mxu0 %v1459
        %1553 = vmatprep.subr.mxu0 0.0
        %1554 = vmatpush1.msra.mxu0 %v1460
        %1555 = vmatprep.subr.mxu0 0.0
        %1556 = vmatpush1.msra.mxu0 %v1461
        %1557 = vmatprep.subr.mxu0 0.0
        %1558 = vmatpush1.msra.mxu0 %v1462
        %1559 = vmatprep.subr.mxu0 0.0
        %1560 = vmatpush1.msra.mxu0 %v1463
        %1561 = vmatprep.subr.mxu0 0.0
        %1562 = vmatpush1.msra.mxu0 %v1464
        %1563 = vmatprep.subr.mxu0 0.0
        %1564 = vmatpush1.msra.mxu0 0.0
        %1565 = vmatprep.subr.mxu0 0.0
        %1566 = vmatpush1.msra.mxu0 0.0
        %1567 = vmatprep.subr.mxu0 0.0
        %1568 = vmatpush1.msra.mxu0 0.0
        %1569 = vmatprep.subr.mxu0 0.0
        %1570 = vmatpush1.msra.mxu0 0.0
        %1571 = vmatprep.subr.mxu0 0.0
        %1572 = vmatpush1.msra.mxu0 0.0
        %1573 = vmatprep.subr.mxu0 0.0
        %1574 = vmatpush1.msra.mxu0 0.0
        %1575 = vmatprep.subr.mxu0 0.0
        %1576 = vmatpush1.msra.mxu0 0.0
        %1577 = vmatprep.subr.mxu0 0.0
        %1578 = vmatpush1.msra.mxu0 0.0
        %1579 = vmatprep.subr.mxu0 0.0
        %1580 = vmatpush1.msra.mxu0 0.0
        %1581 = vmatprep.subr.mxu0 0.0
        %1582 = vmatpush1.msra.mxu0 0.0
        %1583 = vmatprep.subr.mxu0 0.0
        %1584 = vmatpush1.msra.mxu0 0.0
        %1585 = vmatprep.subr.mxu0 0.0
        %1586 = vmatpush1.msra.mxu0 0.0
        %1587 = vmatprep.subr.mxu0 0.0
        %1588 = vmatpush1.msra.mxu0 0.0
        %1589 = vmatprep.subr.mxu0 0.0
        %1590 = vmatpush1.msra.mxu0 0.0
        %1591 = vmatprep.subr.mxu0 0.0
        %1592 = vmatpush1.msra.mxu0 0.0
        %1593 = vmatprep.subr.mxu0 0.0
        %1594 = vmatpush1.msra.mxu0 0.0
        %1595 = vmatprep.subr.mxu0 0.0
        %1596 = vmatpush1.msra.mxu0 0.0
        %1597 = vmatprep.subr.mxu0 0.0
        %1598 = vmatpush1.msra.mxu0 0.0
        %1599 = vmatprep.subr.mxu0 0.0
        %1600 = vmatpush1.msra.mxu0 0.0
        %1601 = vmatprep.subr.mxu0 0.0
        %1602 = vmatpush1.msra.mxu0 0.0
        %1603 = vmatprep.subr.mxu0 0.0
        %1604 = vmatpush1.msra.mxu0 0.0
        %1605 = vmatprep.subr.mxu0 0.0
        %1606 = vmatpush1.msra.mxu0 0.0
        %1607 = vmatprep.subr.mxu0 0.0
        %1608 = vmatpush1.msra.mxu0 0.0
        %1609 = vmatprep.subr.mxu0 0.0
        %1610 = vmatpush1.msra.mxu0 0.0
        %1611 = vmatprep.mubr.f32.mxu0 0.0
        %1612 = vmatmul.mubr.f32.gmra.mrb[0].mxu0 %v1524
        %v1613 = vpop.f32.mrb[0].mxu0
        %v1614 = vadd.f32 %v1486, %v1613
        %v1615 = vpop.f32.mrb[0].mxu0
        %1616 = vmatprep.mubr.f32.mxu0 0.0
        %1617 = vmatmul.mubr.f32.gmra.mrb[0].mxu0 %v1527
        %v1618 = vpop.f32.mrb[0].mxu0
        %v1619 = vadd.f32 %v1491, %v1618
        %v1620 = vpop.f32.mrb[0].mxu0
        %1621 = vmatprep.mubr.f32.mxu0 0.0
        %1622 = vmatmul.mubr.f32.gmra.mrb[0].mxu0 %v1530
        %v1623 = vpop.f32.mrb[0].mxu0
        %v1624 = vadd.f32 %v1496, %v1623
        %v1625 = vpop.f32.mrb[0].mxu0
        %1626 = vmatprep.mubr.f32.mxu0 0.0
        %1627 = vmatmul.mubr.f32.gmra.mrb[0].mxu0 %v1533
        %v1628 = vpop.f32.mrb[0].mxu0
        %v1629 = vadd.f32 %v1501, %v1628
        %v1630 = vpop.f32.mrb[0].mxu0
        %1631 = vmatprep.mubr.f32.mxu0 0.0
        %1632 = vmatmul.mubr.f32.gmra.mrb[0].mxu0 %v1536
        %v1633 = vpop.f32.mrb[0].mxu0
        %v1634 = vadd.f32 %v1506, %v1633
        %v1635 = vpop.f32.mrb[0].mxu0
        %1636 = vmatprep.mubr.f32.mxu0 0.0
        %1637 = vmatmul.mubr.f32.gmra.mrb[0].mxu0 %v1539
        %v1638 = vpop.f32.mrb[0].mxu0
        %v1639 = vadd.f32 %v1511, %v1638
        %v1640 = vpop.f32.mrb[0].mxu0
        %1641 = vmatprep.mubr.f32.mxu0 0.0
        %1642 = vmatmul.mubr.f32.gmra.mrb[0].mxu0 %v1542
        %v1643 = vpop.f32.mrb[0].mxu0
        %v1644 = vadd.f32 %v1516, %v1643
        %v1645 = vpop.f32.mrb[0].mxu0
        %1646 = vmatprep.mubr.f32.mxu0 0.0
        %1647 = vmatmul.mubr.f32.gmra.mrb[0].mxu0 %v1545
        %v1648 = vpop.f32.mrb[0].mxu0
        %v1649 = vadd.f32 %v1521, %v1648
        %v1650 = vpop.f32.mrb[0].mxu0
        %1651 = vdwg.mxu0
        %v1652 = vmul.f32 %v1614, 0.5
        %v1653 = vmul.f32 %v1619, 0.5
        %v1654 = vmul.f32 %v1624, 0.5
        %v1655 = vmul.f32 %v1629, 0.5
        %v1656 = vmul.f32 %v1634, 0.5
        %v1657 = vmul.f32 %v1639, 0.5
        %v1658 = vmul.f32 %v1644, 0.5
        %v1659 = vmul.f32 %v1649, 0.5
        %v1660 = vmul.f32 %v1614, 0.70710677
        %v1661 = vmul.f32 %v1619, 0.70710677
        %v1662 = vmul.f32 %v1624, 0.70710677
        %v1663 = vmul.f32 %v1629, 0.70710677
        %v1664 = vmul.f32 %v1634, 0.70710677
        %v1665 = vmul.f32 %v1639, 0.70710677
        %v1666 = vmul.f32 %v1644, 0.70710677
        %v1667 = vmul.f32 %v1649, 0.70710677
        %v1668 = verf.f32.pop %v1660
        %v1669 = verf.f32.pop %v1661
        %v1670 = verf.f32.pop %v1662
        %v1671 = verf.f32.pop %v1663
        %v1672 = verf.f32.pop %v1664
        %v1673 = verf.f32.pop %v1665
        %v1674 = verf.f32.pop %v1666
        %v1675 = verf.f32.pop %v1667
        %v1676 = vadd.f32 %v1668, 1.0
        %v1677 = vadd.f32 %v1669, 1.0
        %v1678 = vadd.f32 %v1670, 1.0
        %v1679 = vadd.f32 %v1671, 1.0
        %v1680 = vadd.f32 %v1672, 1.0
        %v1681 = vadd.f32 %v1673, 1.0
        %v1682 = vadd.f32 %v1674, 1.0
        %v1683 = vadd.f32 %v1675, 1.0
        %v1684 = vmul.f32 %v1652, %v1676
        %v1685 = vmul.f32 %v1653, %v1677
        %v1686 = vmul.f32 %v1654, %v1678
        %v1687 = vmul.f32 %v1655, %v1679
        %v1688 = vmul.f32 %v1656, %v1680
        %v1689 = vmul.f32 %v1657, %v1681
        %v1690 = vmul.f32 %v1658, %v1682
        %v1691 = vmul.f32 %v1659, %v1683
        %s1692 = scalar_lea.vmem %s385, 320
        %v1693 = vld [vmem:[%s1692] sm:$0xff]
        %v1694 = vld [vmem:[%s1692 + $0x8] sm:$0xff]
        %v1695 = vld [vmem:[%s1692 + $0x10] sm:$0xff]
        %v1696 = vld [vmem:[%s1692 + $0x18] sm:$0xff]
        %v1697 = vld [vmem:[%s1692 + $0x20] sm:$0xff]
        %v1698 = vld [vmem:[%s1692 + $0x28] sm:$0xff]
        %v1699 = vld [vmem:[%s1692 + $0x30] sm:$0xff]
        %v1700 = vld [vmem:[%s1692 + $0x38] sm:$0xff]
        %s1701 = scalar_lea.vmem %s390, 320
        %v1702 = vld [vmem:[%s1701] sm:$0xff]
        %v1703 = vld [vmem:[%s1701 + $0x8] sm:$0xff]
        %v1704 = vld [vmem:[%s1701 + $0x10] sm:$0xff]
        %v1705 = vld [vmem:[%s1701 + $0x18] sm:$0xff]
        %v1706 = vld [vmem:[%s1701 + $0x20] sm:$0xff]
        %v1707 = vld [vmem:[%s1701 + $0x28] sm:$0xff]
        %v1708 = vld [vmem:[%s1701 + $0x30] sm:$0xff]
        %v1709 = vld [vmem:[%s1701 + $0x38] sm:$0xff]
        %1711 = vset.pattern.permute.xlu0 0
        %1712 = vperm.xlu0 %1711, %v1702
        %v1713 = vpop.permute.xlu0 %1712
        %1716 = vset.pattern.permute.xlu0 0
        %1717 = vperm.xlu0 %1716, %v1703
        %v1718 = vpop.permute.xlu0 %1717
        %1721 = vset.pattern.permute.xlu0 0
        %1722 = vperm.xlu0 %1721, %v1704
        %v1723 = vpop.permute.xlu0 %1722
        %1726 = vset.pattern.permute.xlu0 0
        %1727 = vperm.xlu0 %1726, %v1705
        %v1728 = vpop.permute.xlu0 %1727
        %1731 = vset.pattern.permute.xlu0 0
        %1732 = vperm.xlu0 %1731, %v1706
        %v1733 = vpop.permute.xlu0 %1732
        %1736 = vset.pattern.permute.xlu0 0
        %1737 = vperm.xlu0 %1736, %v1707
        %v1738 = vpop.permute.xlu0 %1737
        %1741 = vset.pattern.permute.xlu0 0
        %1742 = vperm.xlu0 %1741, %v1708
        %v1743 = vpop.permute.xlu0 %1742
        %1746 = vset.pattern.permute.xlu0 0
        %1747 = vperm.xlu0 %1746, %v1709
        %v1748 = vpop.permute.xlu0 %1747
        %v1751 = vsel %vm614, %v1693, 0
        %v1754 = vsel %vm614, %v1694, 0
        %v1757 = vsel %vm614, %v1695, 0
        %v1760 = vsel %vm614, %v1696, 0
        %v1763 = vsel %vm614, %v1697, 0
        %v1766 = vsel %vm614, %v1698, 0
        %v1769 = vsel %vm614, %v1699, 0
        %v1772 = vsel %vm614, %v1700, 0
        %1774 = vmatprep.subr.mxu0 0.0
        %1775 = vmatpush1.msra.mxu0 %v1684
        %1776 = vmatprep.subr.mxu0 0.0
        %1777 = vmatpush1.msra.mxu0 %v1685
        %1778 = vmatprep.subr.mxu0 0.0
        %1779 = vmatpush1.msra.mxu0 %v1686
        %1780 = vmatprep.subr.mxu0 0.0
        %1781 = vmatpush1.msra.mxu0 %v1687
        %1782 = vmatprep.subr.mxu0 0.0
        %1783 = vmatpush1.msra.mxu0 %v1688
        %1784 = vmatprep.subr.mxu0 0.0
        %1785 = vmatpush1.msra.mxu0 %v1689
        %1786 = vmatprep.subr.mxu0 0.0
        %1787 = vmatpush1.msra.mxu0 %v1690
        %1788 = vmatprep.subr.mxu0 0.0
        %1789 = vmatpush1.msra.mxu0 %v1691
        %1790 = vmatprep.subr.mxu0 0.0
        %1791 = vmatpush1.msra.mxu0 0.0
        %1792 = vmatprep.subr.mxu0 0.0
        %1793 = vmatpush1.msra.mxu0 0.0
        %1794 = vmatprep.subr.mxu0 0.0
        %1795 = vmatpush1.msra.mxu0 0.0
        %1796 = vmatprep.subr.mxu0 0.0
        %1797 = vmatpush1.msra.mxu0 0.0
        %1798 = vmatprep.subr.mxu0 0.0
        %1799 = vmatpush1.msra.mxu0 0.0
        %1800 = vmatprep.subr.mxu0 0.0
        %1801 = vmatpush1.msra.mxu0 0.0
        %1802 = vmatprep.subr.mxu0 0.0
        %1803 = vmatpush1.msra.mxu0 0.0
        %1804 = vmatprep.subr.mxu0 0.0
        %1805 = vmatpush1.msra.mxu0 0.0
        %1806 = vmatprep.subr.mxu0 0.0
        %1807 = vmatpush1.msra.mxu0 0.0
        %1808 = vmatprep.subr.mxu0 0.0
        %1809 = vmatpush1.msra.mxu0 0.0
        %1810 = vmatprep.subr.mxu0 0.0
        %1811 = vmatpush1.msra.mxu0 0.0
        %1812 = vmatprep.subr.mxu0 0.0
        %1813 = vmatpush1.msra.mxu0 0.0
        %1814 = vmatprep.subr.mxu0 0.0
        %1815 = vmatpush1.msra.mxu0 0.0
        %1816 = vmatprep.subr.mxu0 0.0
        %1817 = vmatpush1.msra.mxu0 0.0
        %1818 = vmatprep.subr.mxu0 0.0
        %1819 = vmatpush1.msra.mxu0 0.0
        %1820 = vmatprep.subr.mxu0 0.0
        %1821 = vmatpush1.msra.mxu0 0.0
        %1822 = vmatprep.subr.mxu0 0.0
        %1823 = vmatpush1.msra.mxu0 0.0
        %1824 = vmatprep.subr.mxu0 0.0
        %1825 = vmatpush1.msra.mxu0 0.0
        %1826 = vmatprep.subr.mxu0 0.0
        %1827 = vmatpush1.msra.mxu0 0.0
        %1828 = vmatprep.subr.mxu0 0.0
        %1829 = vmatpush1.msra.mxu0 0.0
        %1830 = vmatprep.subr.mxu0 0.0
        %1831 = vmatpush1.msra.mxu0 0.0
        %1832 = vmatprep.subr.mxu0 0.0
        %1833 = vmatpush1.msra.mxu0 0.0
        %1834 = vmatprep.subr.mxu0 0.0
        %1835 = vmatpush1.msra.mxu0 0.0
        %1836 = vmatprep.subr.mxu0 0.0
        %1837 = vmatpush1.msra.mxu0 0.0
        %1838 = vmatprep.mubr.f32.mxu0 0.0
        %1839 = vmatmul.mubr.f32.gmra.mrb[0].mxu0 %v1751
        %v1840 = vpop.f32.mrb[0].mxu0
        %v1841 = vadd.f32 %v1713, %v1840
        %v1842 = vpop.f32.mrb[0].mxu0
        %1843 = vmatprep.mubr.f32.mxu0 0.0
        %1844 = vmatmul.mubr.f32.gmra.mrb[0].mxu0 %v1754
        %v1845 = vpop.f32.mrb[0].mxu0
        %v1846 = vadd.f32 %v1718, %v1845
        %v1847 = vpop.f32.mrb[0].mxu0
        %1848 = vmatprep.mubr.f32.mxu0 0.0
        %1849 = vmatmul.mubr.f32.gmra.mrb[0].mxu0 %v1757
        %v1850 = vpop.f32.mrb[0].mxu0
        %v1851 = vadd.f32 %v1723, %v1850
        %v1852 = vpop.f32.mrb[0].mxu0
        %1853 = vmatprep.mubr.f32.mxu0 0.0
        %1854 = vmatmul.mubr.f32.gmra.mrb[0].mxu0 %v1760
        %v1855 = vpop.f32.mrb[0].mxu0
        %v1856 = vadd.f32 %v1728, %v1855
        %v1857 = vpop.f32.mrb[0].mxu0
        %1858 = vmatprep.mubr.f32.mxu0 0.0
        %1859 = vmatmul.mubr.f32.gmra.mrb[0].mxu0 %v1763
        %v1860 = vpop.f32.mrb[0].mxu0
        %v1861 = vadd.f32 %v1733, %v1860
        %v1862 = vpop.f32.mrb[0].mxu0
        %1863 = vmatprep.mubr.f32.mxu0 0.0
        %1864 = vmatmul.mubr.f32.gmra.mrb[0].mxu0 %v1766
        %v1865 = vpop.f32.mrb[0].mxu0
        %v1866 = vadd.f32 %v1738, %v1865
        %v1867 = vpop.f32.mrb[0].mxu0
        %1868 = vmatprep.mubr.f32.mxu0 0.0
        %1869 = vmatmul.mubr.f32.gmra.mrb[0].mxu0 %v1769
        %v1870 = vpop.f32.mrb[0].mxu0
        %v1871 = vadd.f32 %v1743, %v1870
        %v1872 = vpop.f32.mrb[0].mxu0
        %1873 = vmatprep.mubr.f32.mxu0 0.0
        %1874 = vmatmul.mubr.f32.gmra.mrb[0].mxu0 %v1772
        %v1875 = vpop.f32.mrb[0].mxu0
        %v1876 = vadd.f32 %v1748, %v1875
        %v1877 = vpop.f32.mrb[0].mxu0
        %1878 = vdwg.mxu0
        %v1879 = vmul.f32 %v1841, 0.5
        %v1880 = vmul.f32 %v1846, 0.5
        %v1881 = vmul.f32 %v1851, 0.5
        %v1882 = vmul.f32 %v1856, 0.5
        %v1883 = vmul.f32 %v1861, 0.5
        %v1884 = vmul.f32 %v1866, 0.5
        %v1885 = vmul.f32 %v1871, 0.5
        %v1886 = vmul.f32 %v1876, 0.5
        %v1887 = vmul.f32 %v1841, 0.70710677
        %v1888 = vmul.f32 %v1846, 0.70710677
        %v1889 = vmul.f32 %v1851, 0.70710677
        %v1890 = vmul.f32 %v1856, 0.70710677
        %v1891 = vmul.f32 %v1861, 0.70710677
        %v1892 = vmul.f32 %v1866, 0.70710677
        %v1893 = vmul.f32 %v1871, 0.70710677
        %v1894 = vmul.f32 %v1876, 0.70710677
        %v1895 = verf.f32.pop %v1887
        %v1896 = verf.f32.pop %v1888
        %v1897 = verf.f32.pop %v1889
        %v1898 = verf.f32.pop %v1890
        %v1899 = verf.f32.pop %v1891
        %v1900 = verf.f32.pop %v1892
        %v1901 = verf.f32.pop %v1893
        %v1902 = verf.f32.pop %v1894
        %v1903 = vadd.f32 %v1895, 1.0
        %v1904 = vadd.f32 %v1896, 1.0
        %v1905 = vadd.f32 %v1897, 1.0
        %v1906 = vadd.f32 %v1898, 1.0
        %v1907 = vadd.f32 %v1899, 1.0
        %v1908 = vadd.f32 %v1900, 1.0
        %v1909 = vadd.f32 %v1901, 1.0
        %v1910 = vadd.f32 %v1902, 1.0
        %v1911 = vmul.f32 %v1879, %v1903
        %v1912 = vmul.f32 %v1880, %v1904
        %v1913 = vmul.f32 %v1881, %v1905
        %v1914 = vmul.f32 %v1882, %v1906
        %v1915 = vmul.f32 %v1883, %v1907
        %v1916 = vmul.f32 %v1884, %v1908
        %v1917 = vmul.f32 %v1885, %v1909
        %v1918 = vmul.f32 %v1886, %v1910
        %v1919 = vld [vmem:[%s394] sm:$0xff]
        %v1920 = vld [vmem:[%s398] sm:$0xff]
        %1922 = vset.pattern.permute.xlu0 0
        %1923 = vperm.xlu0 %1922, %v1920
        %v1924 = vpop.permute.xlu0 %1923
        %v1927 = vsel %vm614, %v1919, 0
        %1929 = vmatprep.subr.mxu0 0.0
        %1930 = vmatpush1.msra.mxu0 %v1911
        %1931 = vmatprep.subr.mxu0 0.0
        %1932 = vmatpush1.msra.mxu0 %v1912
        %1933 = vmatprep.subr.mxu0 0.0
        %1934 = vmatpush1.msra.mxu0 %v1913
        %1935 = vmatprep.subr.mxu0 0.0
        %1936 = vmatpush1.msra.mxu0 %v1914
        %1937 = vmatprep.subr.mxu0 0.0
        %1938 = vmatpush1.msra.mxu0 %v1915
        %1939 = vmatprep.subr.mxu0 0.0
        %1940 = vmatpush1.msra.mxu0 %v1916
        %1941 = vmatprep.subr.mxu0 0.0
        %1942 = vmatpush1.msra.mxu0 %v1917
        %1943 = vmatprep.subr.mxu0 0.0
        %1944 = vmatpush1.msra.mxu0 %v1918
        %1945 = vmatprep.subr.mxu0 0.0
        %1946 = vmatpush1.msra.mxu0 0.0
        %1947 = vmatprep.subr.mxu0 0.0
        %1948 = vmatpush1.msra.mxu0 0.0
        %1949 = vmatprep.subr.mxu0 0.0
        %1950 = vmatpush1.msra.mxu0 0.0
        %1951 = vmatprep.subr.mxu0 0.0
        %1952 = vmatpush1.msra.mxu0 0.0
        %1953 = vmatprep.subr.mxu0 0.0
        %1954 = vmatpush1.msra.mxu0 0.0
        %1955 = vmatprep.subr.mxu0 0.0
        %1956 = vmatpush1.msra.mxu0 0.0
        %1957 = vmatprep.subr.mxu0 0.0
        %1958 = vmatpush1.msra.mxu0 0.0
        %1959 = vmatprep.subr.mxu0 0.0
        %1960 = vmatpush1.msra.mxu0 0.0
        %1961 = vmatprep.subr.mxu0 0.0
        %1962 = vmatpush1.msra.mxu0 0.0
        %1963 = vmatprep.subr.mxu0 0.0
        %1964 = vmatpush1.msra.mxu0 0.0
        %1965 = vmatprep.subr.mxu0 0.0
        %1966 = vmatpush1.msra.mxu0 0.0
        %1967 = vmatprep.subr.mxu0 0.0
        %1968 = vmatpush1.msra.mxu0 0.0
        %1969 = vmatprep.subr.mxu0 0.0
        %1970 = vmatpush1.msra.mxu0 0.0
        %1971 = vmatprep.subr.mxu0 0.0
        %1972 = vmatpush1.msra.mxu0 0.0
        %1973 = vmatprep.subr.mxu0 0.0
        %1974 = vmatpush1.msra.mxu0 0.0
        %1975 = vmatprep.subr.mxu0 0.0
        %1976 = vmatpush1.msra.mxu0 0.0
        %1977 = vmatprep.subr.mxu0 0.0
        %1978 = vmatpush1.msra.mxu0 0.0
        %1979 = vmatprep.subr.mxu0 0.0
        %1980 = vmatpush1.msra.mxu0 0.0
        %1981 = vmatprep.subr.mxu0 0.0
        %1982 = vmatpush1.msra.mxu0 0.0
        %1983 = vmatprep.subr.mxu0 0.0
        %1984 = vmatpush1.msra.mxu0 0.0
        %1985 = vmatprep.subr.mxu0 0.0
        %1986 = vmatpush1.msra.mxu0 0.0
        %1987 = vmatprep.subr.mxu0 0.0
        %1988 = vmatpush1.msra.mxu0 0.0
        %1989 = vmatprep.subr.mxu0 0.0
        %1990 = vmatpush1.msra.mxu0 0.0
        %1991 = vmatprep.subr.mxu0 0.0
        %1992 = vmatpush1.msra.mxu0 0.0
        %1993 = vmatprep.mubr.f32.mxu0 0.0
        %1994 = vmatmul.mubr.f32.gmra.mrb[0].mxu0 %v1927
        %v1995 = vpop.f32.mrb[0].mxu0
        %v1996 = vadd.f32 %v1924, %v1995
        %v1997 = vpop.f32.mrb[0].mxu0
        %1998 = vdwg.mxu0
        %1999 = vst [vmem:[%s367] sm:$0xff] %v1996
        %s2000 = sand.u32 %s225, 1
        %s2001 = scalar_lea.sflag [#allocation3], %s2000
        %s2002 = sand.u32 %s225, 1
        %s2003 = smul.addr %s2002, 8
        %s2004 = scalar_lea.vmem [#allocation2], %s2003
        // Predicated region
        $region49: #{tpu_custom_call.1} parent=47 // pred_check
          %p2005 = pneg %p235
        $region50: #{tpu_custom_call.1} parent=47 // pred_check_branch
          %2007 = sbr.rel (%p2005) target = $region52
        $region51: #{tpu_custom_call.1} parent=47 // pred_region
          %s2009 = ssub.s32 128, 128
          %2010 = vsyncadd %s2001, %s2009
          %s2011 = sadd.s32 %s26, %s25
          %s2012 = smul.addr %s2011, 128
          %s2013 = scalar_lea.hbm %s7, %s2012
          %s2015 = sshll.u32 %s2004, 4
          %s2016 = int_to_ptr.vmem [resolvable:$true] %s2015
          %2018 = dma.vmem_to_hbm [thread:$0]  %s2016, 128, %s2013, %s2001
        $region52: #{tpu_custom_call.1} parent=47 // pred_fallthru
          _
      $region48: #{tpu_custom_call.1} parent=5 // pred_fallthru
        _
      %p2019 = scmp.le.s32.totalorder 2, %s16
      // Predicated region
      $region53: #{tpu_custom_call.1} parent=5 // pred_check
        %p2020 = pneg %p2019
      $region54: #{tpu_custom_call.1} parent=5 // pred_check_branch
        %2022 = sbr.rel (%p2020) target = $region56
      $region55: #{tpu_custom_call.1} parent=5 // pred_region
        %s2023 = ssub.s32 %s16, 2
        // Predicated region
        $region57: #{tpu_custom_call.1} parent=55 // pred_check
          %p2024 = pneg %p241
        $region58: #{tpu_custom_call.1} parent=55 // pred_check_branch
          %2026 = sbr.rel (%p2024) target = $region60
        $region59: #{tpu_custom_call.1} parent=55 // pred_region
          %s2027 = sand.u32 %s226, 1
          %s2028 = scalar_lea.sflag [#allocation3], %s2027
          %s2029 = sand.u32 %s226, 1
          %s2030 = smul.addr %s2029, 8
          %s2031 = scalar_lea.vmem [#allocation2], %s2030
          %2032 = dma.done %s2028, 128
        $region60: #{tpu_custom_call.1} parent=55 // pred_fallthru
          _
      $region56: #{tpu_custom_call.1} parent=5 // pred_fallthru
        _
    $region6: #{tpu_custom_call.1} parent=1 // loop_footer
      %s20 = sadd.s32 1, %s16
    $region7: #{tpu_custom_call.1} parent=1 // loop_footer_branch
      %15 = sbr.rel target = $region3
    $region8: #{tpu_custom_call.1} parent=1 // loop_exit
      _
    %2033 = vsyncpa [#allocation3], 1
    %s2034 = scalar_lea.sflag [#allocation3], 1
    %2035 = vsyncpa %s2034, 1

</llo_original>
